<compile_context>
chip_gen: v7x
topology: tpu7x:2x2x1
jax: 0.10.0
libtpu: 0.0.40
codegen_flags: <defaults>
</compile_context>

<pallas_src>
import numpy as np
import jax
import jax.numpy as jnp
from jax.experimental import pallas as pl
from jax.experimental.pallas import tpu as pltpu

ACOS_EPS = 1e-4  # default eps of acos_safe in the reference code


# ----------------------------- acos_safe helpers -----------------------------

def _acos_safe_inverse(threshold, eps=ACOS_EPS):
    """Inverse of the (strictly decreasing) acos_safe function, on host."""
    slope = np.arccos(1.0 - eps) / eps
    lo_ang = np.arccos(1.0 - eps)        # acos_safe at x = 1-eps
    hi_ang = np.arccos(-(1.0 - eps))     # acos_safe at x = -(1-eps)
    if threshold <= lo_ang:
        return float((1.0 - eps) + (lo_ang - threshold) / slope)
    elif threshold >= hi_ang:
        return float(-(1.0 - eps) - (threshold - hi_ang) / slope)
    else:
        return float(np.cos(threshold))


def acos_safe_jnp(x, eps=ACOS_EPS):
    sign = jnp.sign(x)
    slope = np.arccos(1.0 - eps) / eps
    return jnp.where(
        jnp.abs(x) <= 1.0 - eps,
        jnp.arccos(jnp.clip(x, -1.0, 1.0)),
        jnp.arccos(sign * (1.0 - eps)) - slope * sign * (jnp.abs(x) - 1.0 + eps),
    )


def _round_up(x, m):
    return ((x + m - 1) // m) * m


# --------------------------------- kernel ------------------------------------

def _make_kernel(b_total, tb, na, x_thr):
    def kernel(y_ref, gt_ref, wts_ref, small_ref, anc_ref, out_ref):
        pid = pl.program_id(0)
        f32 = jnp.float32

        lane = jax.lax.broadcasted_iota(jnp.int32, (1, tb), 1)
        valid = ((pid * tb + lane) < b_total).astype(f32)                # (1, tb)

        a_iota = jax.lax.broadcasted_iota(jnp.int32, (na, tb), 0).astype(f32)

        wts = wts_ref[...]                                               # (na, tb)
        label_f = small_ref[9]                                           # (1, tb)

        # ------------- softmax CE + argmax (sublane reductions) --------------
        maxw = jnp.max(wts, axis=0, keepdims=True)                       # (1, tb)
        lse = jnp.log(jnp.sum(jnp.exp(wts - maxw), axis=0, keepdims=True)) + maxw
        picked = jnp.sum((a_iota == label_f).astype(f32) * wts,
                         axis=0, keepdims=True)
        ce_row = valid * (lse - picked)                                  # (1, tb)

        # first-occurrence argmax over anchors
        cand = jnp.where(wts == maxw, a_iota, float(na))
        preds_f = jnp.min(cand, axis=0, keepdims=True)                   # (1, tb)
        onehot_pred = (a_iota == preds_f).astype(f32)                    # (na, tb)
        correct_row = valid * (preds_f == label_f).astype(f32)           # (1, tb)

        # ------------- quaternion normalization (single EUP rsqrt) -----------
        qw0, qx0, qy0, qz0 = y_ref[0], y_ref[1], y_ref[2], y_ref[3]
        inv = jax.lax.rsqrt(jnp.maximum(
            qw0 * qw0 + qx0 * qx0 + qy0 * qy0 + qz0 * qz0, 1e-16))
        qw, qx, qy, qz = qw0 * inv, qx0 * inv, qy0 * inv, qz0 * inv

        # pr[c] built lazily (2 products each) to keep live (na,tb) planes low
        pr_fns = (
            lambda: 1.0 - 2.0 * (qy * qy) - 2.0 * (qz * qz),
            lambda: 2.0 * (qx * qy) - 2.0 * (qz * qw),
            lambda: 2.0 * (qx * qz) + 2.0 * (qy * qw),
            lambda: 2.0 * (qx * qy) + 2.0 * (qz * qw),
            lambda: 1.0 - 2.0 * (qx * qx) - 2.0 * (qz * qz),
            lambda: 2.0 * (qy * qz) - 2.0 * (qx * qw),
            lambda: 2.0 * (qx * qz) - 2.0 * (qy * qw),
            lambda: 2.0 * (qy * qz) + 2.0 * (qx * qw),
            lambda: 1.0 - 2.0 * (qx * qx) - 2.0 * (qy * qy),
        )

        # ---- fused per-component loop: L2 accumulation + one-hot selects ----
        sq = None
        diag = None
        pr_sel = []
        anc_sel = []
        for c in range(9):
            pr_c = pr_fns[c]()                                           # (na, tb)
            gt_c = gt_ref[c]                                             # (na, tb)
            d = gt_c - pr_c
            sq = d * d if sq is None else sq + d * d
            if c in (0, 4, 8):
                diag = gt_c if diag is None else diag + gt_c
            pr_sel.append(jnp.sum(onehot_pred * pr_c, axis=0, keepdims=True))
            anc_sel.append(jnp.sum(onehot_pred * anc_ref[c], axis=0,
                                   keepdims=True))

        # mask: acos_safe(0.5*(tr(gt_R)-1)) < threshold  <=>  gx > x_thr
        gx = 0.5 * (diag - 1.0)
        mask = (gx > x_thr).astype(f32) * valid                          # (na, tb)
        l2_row = jnp.sum(mask * sq, axis=0, keepdims=True)               # (1, tb)

        # ------ trace(anchors[pred] @ pred_R[pred] @ trueR^T), row vectors ---
        truer = [small_ref[c] for c in range(9)]                         # (1, tb) each
        tr = None
        for j in range(3):
            for k in range(3):
                C = (anc_sel[0 + j] * truer[0 + k]
                     + anc_sel[3 + j] * truer[3 + k]
                     + anc_sel[6 + j] * truer[6 + k])
                term = pr_sel[3 * j + k] * C
                tr = term if tr is None else tr + term
        ang_x = 0.5 * (tr - 1.0)          # acos_safe applied in the wrapper

        # ---------------------- dense (8, tb) output block -------------------
        row = jax.lax.broadcasted_iota(jnp.int32, (8, tb), 0)
        out_ref[...] = (jnp.where(row == 0, ang_x, 0.0)
                        + jnp.where(row == 1, ce_row, 0.0)
                        + jnp.where(row == 2, correct_row, 0.0)
                        + jnp.where(row == 3, l2_row, 0.0))
    return kernel


# --------------------------------- wrapper -----------------------------------

def multitask_detection_loss(wts, label, y, gt_R, anchors, *, nr=4, w=10.0,
                             threshold=1.0, anchor_idx=29):
    """Canonical-regression branch of MultiTaskDetectionLoss.forward
       (label is 1-D, gt_T is None)."""
    assert nr == 4, "only the quaternion mapping (nr=4) branch is implemented"
    b, na = wts.shape
    assert na > anchor_idx, "true_R = gt_R[:, 29] requires na > 29"
    assert na < (1 << 24), "float label/iota comparison requires na < 2^24"
    f32 = jnp.float32

    # batch tile on the lane axis (multiple of 128); >= 2 grid steps once b > 128
    b_pad_128 = _round_up(max(b, 1), 128)
    n128 = b_pad_128 // 128
    tb = 128 if n128 <= 1 else min(512, ((n128 + 1) // 2) * 128)
    b_pad = _round_up(b_pad_128, tb)
    grid = (b_pad // tb,)

    # component-major, anchors-on-sublanes, batch-on-lanes layouts (no big concat)
    y_cm = jnp.transpose(y.astype(f32), (1, 2, 0))                        # (4, na, b)
    gt_cm = jnp.transpose(gt_R.astype(f32).reshape(b, na, 9), (2, 1, 0))  # (9, na, b)
    wts_t = jnp.transpose(wts.astype(f32), (1, 0))                        # (na, b)
    truer = jnp.transpose(gt_R[:, anchor_idx].astype(f32).reshape(b, 9),
                          (1, 0))                                         # (9, b)
    small = jnp.concatenate([truer, label.astype(f32)[None, :]],
                            axis=0)[:, None, :]                           # (10, 1, b)
    anc = jnp.transpose(anchors.astype(f32).reshape(na, 9),
                        (1, 0))[:, :, None]                               # (9, na, 1)

    pad = b_pad - b
    if pad:
        y_cm = jnp.pad(y_cm, ((0, 0), (0, 0), (0, pad)))
        gt_cm = jnp.pad(gt_cm, ((0, 0), (0, 0), (0, pad)))
        wts_t = jnp.pad(wts_t, ((0, 0), (0, pad)))
        small = jnp.pad(small, ((0, 0), (0, 0), (0, pad)))

    x_thr = _acos_safe_inverse(float(threshold))
    kernel = _make_kernel(b, tb, na, x_thr)

    cost = pl.CostEstimate(
        flops=int(b_pad) * int(na) * 150,
        transcendentals=int(b_pad) * int(na) * 2,
        bytes_accessed=4 * (14 * b_pad * na + 10 * b_pad + 9 * na + 8 * b_pad),
    )

    out = pl.pallas_call(
        kernel,
        out_shape=jax.ShapeDtypeStruct((8, b_pad), f32),
        grid_spec=pltpu.PrefetchScalarGridSpec(
            num_scalar_prefetch=0,
            grid=grid,
            in_specs=[
                pl.BlockSpec((4, na, tb), lambda i: (0, 0, i)),   # quaternion y
                pl.BlockSpec((9, na, tb), lambda i: (0, 0, i)),   # gt_R components
                pl.BlockSpec((na, tb), lambda i: (0, i)),         # wts
                pl.BlockSpec((10, 1, tb), lambda i: (0, 0, i)),   # true_R + label
                pl.BlockSpec((9, na, 1), lambda i: (0, 0, 0)),    # anchors
            ],
            out_specs=pl.BlockSpec((8, tb), lambda i: (0, i)),
        ),
        compiler_params=pltpu.CompilerParams(
            dimension_semantics=("parallel",),
            vmem_limit_bytes=32 * 1024 * 1024,
        ),
        cost_estimate=cost,
    )(y_cm, gt_cm, wts_t, small, anc)

    # tiny O(b) finishing work in JAX (padded lanes are zeroed by the valid mask)
    cls_loss = jnp.sum(out[1]) / float(b)
    r_acc = jnp.sum(out[2]) / float(b)
    wl2 = float(w) * jnp.sum(out[3])
    loss = cls_loss + wl2
    angles = acos_safe_jnp(out[0, :b])   # mean_angular_error(pred_R, true_R)
    return loss, cls_loss, wl2, r_acc, angles
    # TODO(synk): alignment-regression branch (gt_T given, 2-D label) needs
    # so3_mean -> torch.svd/torch.det, which has no Pallas equivalent.


# --------------------------- pure-JAX reference -------------------------------

def _quat_to_R_ref(q):
    n = jnp.maximum(jnp.sqrt(jnp.sum(q * q, axis=1, keepdims=True)), 1e-8)
    q = q / n
    qw, qx, qy, qz = q[:, 0], q[:, 1], q[:, 2], q[:, 3]
    xx, yy, zz = qx * qx, qy * qy, qz * qz
    xy, xz, yz = qx * qy, qx * qz, qy * qz
    xw, yw, zw = qx * qw, qy * qw, qz * qw
    flat = jnp.stack([1 - 2 * yy - 2 * zz, 2 * xy - 2 * zw, 2 * xz + 2 * yw,
                      2 * xy + 2 * zw, 1 - 2 * xx - 2 * zz, 2 * yz - 2 * xw,
                      2 * xz - 2 * yw, 2 * yz + 2 * xw, 1 - 2 * xx - 2 * yy],
                     axis=-1)
    return flat.reshape(-1, 3, 3)


def _ref_forward(wts, label, y, gt_R, anchors, nr=4, w=10.0, threshold=1.0):
    b, na = wts.shape
    true_R = gt_R[:, 29]
    lse = jax.scipy.special.logsumexp(wts, axis=1)
    picked = wts[jnp.arange(b), label]
    cls_loss = jnp.mean(lse - picked)
    pred_label = jnp.argmax(wts, axis=1)
    r_acc = jnp.mean((pred_label == label).astype(jnp.float32))
    q = jnp.transpose(y, (0, 2, 1)).reshape(-1, nr)
    pred_RAnchor = _quat_to_R_ref(q).reshape(b, na, 3, 3)
    gt_trace = jnp.trace(gt_R.reshape(-1, 3, 3), axis1=1, axis2=2)
    gt_bias = acos_safe_jnp(0.5 * (gt_trace - 1.0)).reshape(b, na)
    mask = (gt_bias < threshold).astype(jnp.float32)[:, :, None, None]
    l2 = jnp.sum((gt_R * mask - pred_RAnchor * mask) ** 2)
    loss = cls_loss + w * l2
    preds = jnp.argmax(wts, axis=1)
    pred_R = pred_RAnchor[jnp.arange(b), preds]
    pred_R = jnp.einsum('bij,bjk->bik', anchors[preds], pred_R)
    R_diff = jnp.einsum('bij,bkj->bik', pred_R, true_R)
    ang = acos_safe_jnp(0.5 * (jnp.trace(R_diff, axis1=1, axis2=2) - 1.0))
    return loss, cls_loss, w * l2, r_acc, ang


# ---------------------------------- main --------------------------------------

def _random_rotations(key, n):
    q = jax.random.normal(key, (n, 4), dtype=jnp.float32)
    return _quat_to_R_ref(q)


if __name__ == "__main__":
    b, na, nr = 2, 60, 4
    key = jax.random.PRNGKey(0)
    k_anc, k_gt, k_wts, k_lab, k_y = jax.random.split(key, 5)

    anchors = _random_rotations(k_anc, na)                                  # (na,3,3)
    gt_R = _random_rotations(k_gt, b * na).reshape(b, na, 3, 3)             # (b,na,3,3)
    wts = jax.random.normal(k_wts, (b, na), dtype=jnp.float32)              # (b,na)
    label = jax.random.randint(k_lab, (b,), 0, na, dtype=jnp.int32)         # (b,)
    y = jax.random.normal(k_y, (b, nr, na), dtype=jnp.float32)              # (b,nr,na)

    out = multitask_detection_loss(wts, label, y, gt_R, anchors,
                                   nr=nr, w=10.0, threshold=1.0)
    out = jax.block_until_ready(out)

    ref = _ref_forward(wts, label, y, gt_R, anchors, nr=nr, w=10.0, threshold=1.0)
    ref = jax.block_until_ready(ref)

    names = ["loss", "cls_loss", "w*l2_loss", "r_acc", "angular_error"]
    for name, a, r in zip(names, out, ref):
        np.testing.assert_allclose(np.asarray(a), np.asarray(r),
                                   rtol=1e-4, atol=1e-3, err_msg=name)
    print("KERNEL_OK")
</pallas_src>

<mosaic_0001>
module attributes {stable_mosaic.version = 11 : i64} {
  func.func @kernel(%arg0: i32, %arg1: memref<4x60x128xf32, #tpu.memory_space<vmem>>, %arg2: memref<9x60x128xf32, #tpu.memory_space<vmem>>, %arg3: memref<60x128xf32, #tpu.memory_space<vmem>>, %arg4: memref<10x1x128xf32, #tpu.memory_space<vmem>>, %arg5: memref<9x60x1xf32, #tpu.memory_space<vmem>>, %arg6: memref<8x128xf32, #tpu.memory_space<vmem>>) attributes {dimension_semantics = [#tpu.dimension_semantics<parallel>], iteration_bounds = array<i64: 1>, scalar_prefetch = 0 : i64, scratch_operands = 0 : i64, tpu.core_type = #tpu.core_type<tc>, window_params = [{transform_indices = @transform_0, window_bounds = array<i64: 4, 60, 128>}, {transform_indices = @transform_1, window_bounds = array<i64: 9, 60, 128>}, {transform_indices = @transform_2, window_bounds = array<i64: 60, 128>}, {transform_indices = @transform_3, window_bounds = array<i64: 10, 1, 128>}, {pipeline_mode = #tpu.pipeline_mode<synchronous>, transform_indices = @transform_4, window_bounds = array<i64: 9, 60, 1>}, {transform_indices = @transform_5, window_bounds = array<i64: 8, 128>}]} {
    %0 = tpu.iota {dimensions = array<i32: 1>} : vector<1x128xi32>
    %c128_i32 = arith.constant 128 : i32
    %1 = arith.muli %arg0, %c128_i32 : i32
    %2 = vector.broadcast %1 : i32 to vector<1x128xi32>
    %3 = arith.addi %2, %0 : vector<1x128xi32>
    %c2_i32 = arith.constant 2 : i32
    %4 = vector.broadcast %c2_i32 : i32 to vector<1x128xi32>
    %5 = arith.cmpi slt, %3, %4 : vector<1x128xi32>
    %6 = arith.extui %5 : vector<1x128xi1> to vector<1x128xi32>
    %7 = arith.sitofp %6 : vector<1x128xi32> to vector<1x128xf32>
    %8 = tpu.iota {dimensions = array<i32: 0>} : vector<60x128xi32>
    %9 = arith.sitofp %8 : vector<60x128xi32> to vector<60x128xf32>
    %c0 = arith.constant 0 : index
    %c0_0 = arith.constant 0 : index
    %10 = vector.load %arg3[%c0, %c0_0] : memref<60x128xf32, #tpu.memory_space<vmem>>, vector<60x128xf32>
    %c9 = arith.constant 9 : index
    %c0_1 = arith.constant 0 : index
    %c0_2 = arith.constant 0 : index
    %11 = vector.load %arg4[%c9, %c0_1, %c0_2] : memref<10x1x128xf32, #tpu.memory_space<vmem>>, vector<1x1x128xf32>
    %12 = vector.shape_cast %11 : vector<1x1x128xf32> to vector<1x128xf32>
    %cst = arith.constant dense<0xFF800000> : vector<128xf32>
    %13 = vector.multi_reduction <maximumf>, %10, %cst [0] : vector<60x128xf32> to vector<128xf32>
    %14 = vector.shape_cast %13 : vector<128xf32> to vector<1x128xf32>
    %15 = vector.broadcast %14 : vector<1x128xf32> to vector<60x128xf32>
    %16 = arith.subf %10, %15 : vector<60x128xf32>
    %17 = math.exp %16 : vector<60x128xf32>
    %cst_3 = arith.constant dense<0.000000e+00> : vector<128xf32>
    %18 = vector.multi_reduction <add>, %17, %cst_3 [0] : vector<60x128xf32> to vector<128xf32>
    %19 = vector.shape_cast %18 : vector<128xf32> to vector<1x128xf32>
    %20 = math.log %19 : vector<1x128xf32>
    %21 = arith.addf %20, %14 : vector<1x128xf32>
    %22 = vector.broadcast %12 : vector<1x128xf32> to vector<60x128xf32>
    %23 = arith.cmpf oeq, %9, %22 : vector<60x128xf32>
    %24 = arith.extui %23 : vector<60x128xi1> to vector<60x128xi32>
    %25 = arith.sitofp %24 : vector<60x128xi32> to vector<60x128xf32>
    %26 = arith.mulf %25, %10 : vector<60x128xf32>
    %cst_4 = arith.constant dense<0.000000e+00> : vector<128xf32>
    %27 = vector.multi_reduction <add>, %26, %cst_4 [0] : vector<60x128xf32> to vector<128xf32>
    %28 = vector.shape_cast %27 : vector<128xf32> to vector<1x128xf32>
    %29 = arith.subf %21, %28 : vector<1x128xf32>
    %30 = arith.mulf %7, %29 : vector<1x128xf32>
    %31 = vector.broadcast %14 : vector<1x128xf32> to vector<60x128xf32>
    %32 = arith.cmpf oeq, %10, %31 : vector<60x128xf32>
    %cst_5 = arith.constant 6.000000e+01 : f32
    %33 = vector.broadcast %cst_5 : f32 to vector<60x128xf32>
    %34 = arith.select %32, %9, %33 : vector<60x128xi1>, vector<60x128xf32>
    %cst_6 = arith.constant dense<0x7F800000> : vector<128xf32>
    %35 = vector.multi_reduction <minimumf>, %34, %cst_6 [0] : vector<60x128xf32> to vector<128xf32>
    %36 = vector.shape_cast %35 : vector<128xf32> to vector<1x128xf32>
    %37 = vector.broadcast %36 : vector<1x128xf32> to vector<60x128xf32>
    %38 = arith.cmpf oeq, %9, %37 : vector<60x128xf32>
    %39 = arith.extui %38 : vector<60x128xi1> to vector<60x128xi32>
    %40 = arith.sitofp %39 : vector<60x128xi32> to vector<60x128xf32>
    %41 = arith.cmpf oeq, %36, %12 : vector<1x128xf32>
    %42 = arith.extui %41 : vector<1x128xi1> to vector<1x128xi32>
    %43 = arith.sitofp %42 : vector<1x128xi32> to vector<1x128xf32>
    %44 = arith.mulf %7, %43 : vector<1x128xf32>
    %c0_7 = arith.constant 0 : index
    %c0_8 = arith.constant 0 : index
    %c0_9 = arith.constant 0 : index
    %45 = vector.load %arg1[%c0_7, %c0_8, %c0_9] : memref<4x60x128xf32, #tpu.memory_space<vmem>>, vector<1x60x128xf32>
    %46 = vector.shape_cast %45 : vector<1x60x128xf32> to vector<60x128xf32>
    %c1 = arith.constant 1 : index
    %c0_10 = arith.constant 0 : index
    %c0_11 = arith.constant 0 : index
    %47 = vector.load %arg1[%c1, %c0_10, %c0_11] : memref<4x60x128xf32, #tpu.memory_space<vmem>>, vector<1x60x128xf32>
    %48 = vector.shape_cast %47 : vector<1x60x128xf32> to vector<60x128xf32>
    %c2 = arith.constant 2 : index
    %c0_12 = arith.constant 0 : index
    %c0_13 = arith.constant 0 : index
    %49 = vector.load %arg1[%c2, %c0_12, %c0_13] : memref<4x60x128xf32, #tpu.memory_space<vmem>>, vector<1x60x128xf32>
    %50 = vector.shape_cast %49 : vector<1x60x128xf32> to vector<60x128xf32>
    %c3 = arith.constant 3 : index
    %c0_14 = arith.constant 0 : index
    %c0_15 = arith.constant 0 : index
    %51 = vector.load %arg1[%c3, %c0_14, %c0_15] : memref<4x60x128xf32, #tpu.memory_space<vmem>>, vector<1x60x128xf32>
    %52 = vector.shape_cast %51 : vector<1x60x128xf32> to vector<60x128xf32>
    %53 = arith.mulf %46, %46 : vector<60x128xf32>
    %54 = arith.mulf %48, %48 : vector<60x128xf32>
    %55 = arith.addf %53, %54 : vector<60x128xf32>
    %56 = arith.mulf %50, %50 : vector<60x128xf32>
    %57 = arith.addf %55, %56 : vector<60x128xf32>
    %58 = arith.mulf %52, %52 : vector<60x128xf32>
    %59 = arith.addf %57, %58 : vector<60x128xf32>
    %cst_16 = arith.constant 1.000000e-16 : f32
    %60 = vector.broadcast %cst_16 : f32 to vector<60x128xf32>
    %61 = arith.maximumf %59, %60 : vector<60x128xf32>
    %62 = math.rsqrt %61 : vector<60x128xf32>
    %63 = arith.mulf %46, %62 : vector<60x128xf32>
    %64 = arith.mulf %48, %62 : vector<60x128xf32>
    %65 = arith.mulf %50, %62 : vector<60x128xf32>
    %66 = arith.mulf %52, %62 : vector<60x128xf32>
    %67 = arith.mulf %65, %65 : vector<60x128xf32>
    %cst_17 = arith.constant 2.000000e+00 : f32
    %68 = vector.broadcast %cst_17 : f32 to vector<60x128xf32>
    %69 = arith.mulf %68, %67 : vector<60x128xf32>
    %cst_18 = arith.constant 1.000000e+00 : f32
    %70 = vector.broadcast %cst_18 : f32 to vector<60x128xf32>
    %71 = arith.subf %70, %69 : vector<60x128xf32>
    %72 = arith.mulf %66, %66 : vector<60x128xf32>
    %cst_19 = arith.constant 2.000000e+00 : f32
    %73 = vector.broadcast %cst_19 : f32 to vector<60x128xf32>
    %74 = arith.mulf %73, %72 : vector<60x128xf32>
    %75 = arith.subf %71, %74 : vector<60x128xf32>
    %c0_20 = arith.constant 0 : index
    %c0_21 = arith.constant 0 : index
    %c0_22 = arith.constant 0 : index
    %76 = vector.load %arg2[%c0_20, %c0_21, %c0_22] : memref<9x60x128xf32, #tpu.memory_space<vmem>>, vector<1x60x128xf32>
    %77 = vector.shape_cast %76 : vector<1x60x128xf32> to vector<60x128xf32>
    %78 = arith.subf %77, %75 : vector<60x128xf32>
    %79 = arith.mulf %78, %78 : vector<60x128xf32>
    %80 = arith.mulf %40, %75 : vector<60x128xf32>
    %cst_23 = arith.constant dense<0.000000e+00> : vector<128xf32>
    %81 = vector.multi_reduction <add>, %80, %cst_23 [0] : vector<60x128xf32> to vector<128xf32>
    %82 = vector.shape_cast %81 : vector<128xf32> to vector<1x128xf32>
    %c0_24 = arith.constant 0 : index
    %c0_25 = arith.constant 0 : index
    %c0_26 = arith.constant 0 : index
    %83 = vector.load %arg5[%c0_24, %c0_25, %c0_26] : memref<9x60x1xf32, #tpu.memory_space<vmem>>, vector<1x60x1xf32>
    %84 = vector.shape_cast %83 : vector<1x60x1xf32> to vector<60x1xf32>
    %85 = vector.broadcast %84 : vector<60x1xf32> to vector<60x128xf32>
    %86 = arith.mulf %40, %85 : vector<60x128xf32>
    %cst_27 = arith.constant dense<0.000000e+00> : vector<128xf32>
    %87 = vector.multi_reduction <add>, %86, %cst_27 [0] : vector<60x128xf32> to vector<128xf32>
    %88 = vector.shape_cast %87 : vector<128xf32> to vector<1x128xf32>
    %89 = arith.mulf %64, %65 : vector<60x128xf32>
    %cst_28 = arith.constant 2.000000e+00 : f32
    %90 = vector.broadcast %cst_28 : f32 to vector<60x128xf32>
    %91 = arith.mulf %90, %89 : vector<60x128xf32>
    %92 = arith.mulf %66, %63 : vector<60x128xf32>
    %cst_29 = arith.constant 2.000000e+00 : f32
    %93 = vector.broadcast %cst_29 : f32 to vector<60x128xf32>
    %94 = arith.mulf %93, %92 : vector<60x128xf32>
    %95 = arith.subf %91, %94 : vector<60x128xf32>
    %c1_30 = arith.constant 1 : index
    %c0_31 = arith.constant 0 : index
    %c0_32 = arith.constant 0 : index
    %96 = vector.load %arg2[%c1_30, %c0_31, %c0_32] : memref<9x60x128xf32, #tpu.memory_space<vmem>>, vector<1x60x128xf32>
    %97 = vector.shape_cast %96 : vector<1x60x128xf32> to vector<60x128xf32>
    %98 = arith.subf %97, %95 : vector<60x128xf32>
    %99 = arith.mulf %98, %98 : vector<60x128xf32>
    %100 = arith.addf %79, %99 : vector<60x128xf32>
    %101 = arith.mulf %40, %95 : vector<60x128xf32>
    %cst_33 = arith.constant dense<0.000000e+00> : vector<128xf32>
    %102 = vector.multi_reduction <add>, %101, %cst_33 [0] : vector<60x128xf32> to vector<128xf32>
    %103 = vector.shape_cast %102 : vector<128xf32> to vector<1x128xf32>
    %c1_34 = arith.constant 1 : index
    %c0_35 = arith.constant 0 : index
    %c0_36 = arith.constant 0 : index
    %104 = vector.load %arg5[%c1_34, %c0_35, %c0_36] : memref<9x60x1xf32, #tpu.memory_space<vmem>>, vector<1x60x1xf32>
    %105 = vector.shape_cast %104 : vector<1x60x1xf32> to vector<60x1xf32>
    %106 = vector.broadcast %105 : vector<60x1xf32> to vector<60x128xf32>
    %107 = arith.mulf %40, %106 : vector<60x128xf32>
    %cst_37 = arith.constant dense<0.000000e+00> : vector<128xf32>
    %108 = vector.multi_reduction <add>, %107, %cst_37 [0] : vector<60x128xf32> to vector<128xf32>
    %109 = vector.shape_cast %108 : vector<128xf32> to vector<1x128xf32>
    %110 = arith.mulf %64, %66 : vector<60x128xf32>
    %cst_38 = arith.constant 2.000000e+00 : f32
    %111 = vector.broadcast %cst_38 : f32 to vector<60x128xf32>
    %112 = arith.mulf %111, %110 : vector<60x128xf32>
    %113 = arith.mulf %65, %63 : vector<60x128xf32>
    %cst_39 = arith.constant 2.000000e+00 : f32
    %114 = vector.broadcast %cst_39 : f32 to vector<60x128xf32>
    %115 = arith.mulf %114, %113 : vector<60x128xf32>
    %116 = arith.addf %112, %115 : vector<60x128xf32>
    %c2_40 = arith.constant 2 : index
    %c0_41 = arith.constant 0 : index
    %c0_42 = arith.constant 0 : index
    %117 = vector.load %arg2[%c2_40, %c0_41, %c0_42] : memref<9x60x128xf32, #tpu.memory_space<vmem>>, vector<1x60x128xf32>
    %118 = vector.shape_cast %117 : vector<1x60x128xf32> to vector<60x128xf32>
    %119 = arith.subf %118, %116 : vector<60x128xf32>
    %120 = arith.mulf %119, %119 : vector<60x128xf32>
    %121 = arith.addf %100, %120 : vector<60x128xf32>
    %122 = arith.mulf %40, %116 : vector<60x128xf32>
    %cst_43 = arith.constant dense<0.000000e+00> : vector<128xf32>
    %123 = vector.multi_reduction <add>, %122, %cst_43 [0] : vector<60x128xf32> to vector<128xf32>
    %124 = vector.shape_cast %123 : vector<128xf32> to vector<1x128xf32>
    %c2_44 = arith.constant 2 : index
    %c0_45 = arith.constant 0 : index
    %c0_46 = arith.constant 0 : index
    %125 = vector.load %arg5[%c2_44, %c0_45, %c0_46] : memref<9x60x1xf32, #tpu.memory_space<vmem>>, vector<1x60x1xf32>
    %126 = vector.shape_cast %125 : vector<1x60x1xf32> to vector<60x1xf32>
    %127 = vector.broadcast %126 : vector<60x1xf32> to vector<60x128xf32>
    %128 = arith.mulf %40, %127 : vector<60x128xf32>
    %cst_47 = arith.constant dense<0.000000e+00> : vector<128xf32>
    %129 = vector.multi_reduction <add>, %128, %cst_47 [0] : vector<60x128xf32> to vector<128xf32>
    %130 = vector.shape_cast %129 : vector<128xf32> to vector<1x128xf32>
    %131 = arith.mulf %64, %65 : vector<60x128xf32>
    %cst_48 = arith.constant 2.000000e+00 : f32
    %132 = vector.broadcast %cst_48 : f32 to vector<60x128xf32>
    %133 = arith.mulf %132, %131 : vector<60x128xf32>
    %134 = arith.mulf %66, %63 : vector<60x128xf32>
    %cst_49 = arith.constant 2.000000e+00 : f32
    %135 = vector.broadcast %cst_49 : f32 to vector<60x128xf32>
    %136 = arith.mulf %135, %134 : vector<60x128xf32>
    %137 = arith.addf %133, %136 : vector<60x128xf32>
    %c3_50 = arith.constant 3 : index
    %c0_51 = arith.constant 0 : index
    %c0_52 = arith.constant 0 : index
    %138 = vector.load %arg2[%c3_50, %c0_51, %c0_52] : memref<9x60x128xf32, #tpu.memory_space<vmem>>, vector<1x60x128xf32>
    %139 = vector.shape_cast %138 : vector<1x60x128xf32> to vector<60x128xf32>
    %140 = arith.subf %139, %137 : vector<60x128xf32>
    %141 = arith.mulf %140, %140 : vector<60x128xf32>
    %142 = arith.addf %121, %141 : vector<60x128xf32>
    %143 = arith.mulf %40, %137 : vector<60x128xf32>
    %cst_53 = arith.constant dense<0.000000e+00> : vector<128xf32>
    %144 = vector.multi_reduction <add>, %143, %cst_53 [0] : vector<60x128xf32> to vector<128xf32>
    %145 = vector.shape_cast %144 : vector<128xf32> to vector<1x128xf32>
    %c3_54 = arith.constant 3 : index
    %c0_55 = arith.constant 0 : index
    %c0_56 = arith.constant 0 : index
    %146 = vector.load %arg5[%c3_54, %c0_55, %c0_56] : memref<9x60x1xf32, #tpu.memory_space<vmem>>, vector<1x60x1xf32>
    %147 = vector.shape_cast %146 : vector<1x60x1xf32> to vector<60x1xf32>
    %148 = vector.broadcast %147 : vector<60x1xf32> to vector<60x128xf32>
    %149 = arith.mulf %40, %148 : vector<60x128xf32>
    %cst_57 = arith.constant dense<0.000000e+00> : vector<128xf32>
    %150 = vector.multi_reduction <add>, %149, %cst_57 [0] : vector<60x128xf32> to vector<128xf32>
    %151 = vector.shape_cast %150 : vector<128xf32> to vector<1x128xf32>
    %152 = arith.mulf %64, %64 : vector<60x128xf32>
    %cst_58 = arith.constant 2.000000e+00 : f32
    %153 = vector.broadcast %cst_58 : f32 to vector<60x128xf32>
    %154 = arith.mulf %153, %152 : vector<60x128xf32>
    %cst_59 = arith.constant 1.000000e+00 : f32
    %155 = vector.broadcast %cst_59 : f32 to vector<60x128xf32>
    %156 = arith.subf %155, %154 : vector<60x128xf32>
    %157 = arith.mulf %66, %66 : vector<60x128xf32>
    %cst_60 = arith.constant 2.000000e+00 : f32
    %158 = vector.broadcast %cst_60 : f32 to vector<60x128xf32>
    %159 = arith.mulf %158, %157 : vector<60x128xf32>
    %160 = arith.subf %156, %159 : vector<60x128xf32>
    %c4 = arith.constant 4 : index
    %c0_61 = arith.constant 0 : index
    %c0_62 = arith.constant 0 : index
    %161 = vector.load %arg2[%c4, %c0_61, %c0_62] : memref<9x60x128xf32, #tpu.memory_space<vmem>>, vector<1x60x128xf32>
    %162 = vector.shape_cast %161 : vector<1x60x128xf32> to vector<60x128xf32>
    %163 = arith.subf %162, %160 : vector<60x128xf32>
    %164 = arith.mulf %163, %163 : vector<60x128xf32>
    %165 = arith.addf %142, %164 : vector<60x128xf32>
    %166 = arith.addf %77, %162 : vector<60x128xf32>
    %167 = arith.mulf %40, %160 : vector<60x128xf32>
    %cst_63 = arith.constant dense<0.000000e+00> : vector<128xf32>
    %168 = vector.multi_reduction <add>, %167, %cst_63 [0] : vector<60x128xf32> to vector<128xf32>
    %169 = vector.shape_cast %168 : vector<128xf32> to vector<1x128xf32>
    %c4_64 = arith.constant 4 : index
    %c0_65 = arith.constant 0 : index
    %c0_66 = arith.constant 0 : index
    %170 = vector.load %arg5[%c4_64, %c0_65, %c0_66] : memref<9x60x1xf32, #tpu.memory_space<vmem>>, vector<1x60x1xf32>
    %171 = vector.shape_cast %170 : vector<1x60x1xf32> to vector<60x1xf32>
    %172 = vector.broadcast %171 : vector<60x1xf32> to vector<60x128xf32>
    %173 = arith.mulf %40, %172 : vector<60x128xf32>
    %cst_67 = arith.constant dense<0.000000e+00> : vector<128xf32>
    %174 = vector.multi_reduction <add>, %173, %cst_67 [0] : vector<60x128xf32> to vector<128xf32>
    %175 = vector.shape_cast %174 : vector<128xf32> to vector<1x128xf32>
    %176 = arith.mulf %65, %66 : vector<60x128xf32>
    %cst_68 = arith.constant 2.000000e+00 : f32
    %177 = vector.broadcast %cst_68 : f32 to vector<60x128xf32>
    %178 = arith.mulf %177, %176 : vector<60x128xf32>
    %179 = arith.mulf %64, %63 : vector<60x128xf32>
    %cst_69 = arith.constant 2.000000e+00 : f32
    %180 = vector.broadcast %cst_69 : f32 to vector<60x128xf32>
    %181 = arith.mulf %180, %179 : vector<60x128xf32>
    %182 = arith.subf %178, %181 : vector<60x128xf32>
    %c5 = arith.constant 5 : index
    %c0_70 = arith.constant 0 : index
    %c0_71 = arith.constant 0 : index
    %183 = vector.load %arg2[%c5, %c0_70, %c0_71] : memref<9x60x128xf32, #tpu.memory_space<vmem>>, vector<1x60x128xf32>
    %184 = vector.shape_cast %183 : vector<1x60x128xf32> to vector<60x128xf32>
    %185 = arith.subf %184, %182 : vector<60x128xf32>
    %186 = arith.mulf %185, %185 : vector<60x128xf32>
    %187 = arith.addf %165, %186 : vector<60x128xf32>
    %188 = arith.mulf %40, %182 : vector<60x128xf32>
    %cst_72 = arith.constant dense<0.000000e+00> : vector<128xf32>
    %189 = vector.multi_reduction <add>, %188, %cst_72 [0] : vector<60x128xf32> to vector<128xf32>
    %190 = vector.shape_cast %189 : vector<128xf32> to vector<1x128xf32>
    %c5_73 = arith.constant 5 : index
    %c0_74 = arith.constant 0 : index
    %c0_75 = arith.constant 0 : index
    %191 = vector.load %arg5[%c5_73, %c0_74, %c0_75] : memref<9x60x1xf32, #tpu.memory_space<vmem>>, vector<1x60x1xf32>
    %192 = vector.shape_cast %191 : vector<1x60x1xf32> to vector<60x1xf32>
    %193 = vector.broadcast %192 : vector<60x1xf32> to vector<60x128xf32>
    %194 = arith.mulf %40, %193 : vector<60x128xf32>
    %cst_76 = arith.constant dense<0.000000e+00> : vector<128xf32>
    %195 = vector.multi_reduction <add>, %194, %cst_76 [0] : vector<60x128xf32> to vector<128xf32>
    %196 = vector.shape_cast %195 : vector<128xf32> to vector<1x128xf32>
    %197 = arith.mulf %64, %66 : vector<60x128xf32>
    %cst_77 = arith.constant 2.000000e+00 : f32
    %198 = vector.broadcast %cst_77 : f32 to vector<60x128xf32>
    %199 = arith.mulf %198, %197 : vector<60x128xf32>
    %200 = arith.mulf %65, %63 : vector<60x128xf32>
    %cst_78 = arith.constant 2.000000e+00 : f32
    %201 = vector.broadcast %cst_78 : f32 to vector<60x128xf32>
    %202 = arith.mulf %201, %200 : vector<60x128xf32>
    %203 = arith.subf %199, %202 : vector<60x128xf32>
    %c6 = arith.constant 6 : index
    %c0_79 = arith.constant 0 : index
    %c0_80 = arith.constant 0 : index
    %204 = vector.load %arg2[%c6, %c0_79, %c0_80] : memref<9x60x128xf32, #tpu.memory_space<vmem>>, vector<1x60x128xf32>
    %205 = vector.shape_cast %204 : vector<1x60x128xf32> to vector<60x128xf32>
    %206 = arith.subf %205, %203 : vector<60x128xf32>
    %207 = arith.mulf %206, %206 : vector<60x128xf32>
    %208 = arith.addf %187, %207 : vector<60x128xf32>
    %209 = arith.mulf %40, %203 : vector<60x128xf32>
    %cst_81 = arith.constant dense<0.000000e+00> : vector<128xf32>
    %210 = vector.multi_reduction <add>, %209, %cst_81 [0] : vector<60x128xf32> to vector<128xf32>
    %211 = vector.shape_cast %210 : vector<128xf32> to vector<1x128xf32>
    %c6_82 = arith.constant 6 : index
    %c0_83 = arith.constant 0 : index
    %c0_84 = arith.constant 0 : index
    %212 = vector.load %arg5[%c6_82, %c0_83, %c0_84] : memref<9x60x1xf32, #tpu.memory_space<vmem>>, vector<1x60x1xf32>
    %213 = vector.shape_cast %212 : vector<1x60x1xf32> to vector<60x1xf32>
    %214 = vector.broadcast %213 : vector<60x1xf32> to vector<60x128xf32>
    %215 = arith.mulf %40, %214 : vector<60x128xf32>
    %cst_85 = arith.constant dense<0.000000e+00> : vector<128xf32>
    %216 = vector.multi_reduction <add>, %215, %cst_85 [0] : vector<60x128xf32> to vector<128xf32>
    %217 = vector.shape_cast %216 : vector<128xf32> to vector<1x128xf32>
    %218 = arith.mulf %65, %66 : vector<60x128xf32>
    %cst_86 = arith.constant 2.000000e+00 : f32
    %219 = vector.broadcast %cst_86 : f32 to vector<60x128xf32>
    %220 = arith.mulf %219, %218 : vector<60x128xf32>
    %221 = arith.mulf %64, %63 : vector<60x128xf32>
    %cst_87 = arith.constant 2.000000e+00 : f32
    %222 = vector.broadcast %cst_87 : f32 to vector<60x128xf32>
    %223 = arith.mulf %222, %221 : vector<60x128xf32>
    %224 = arith.addf %220, %223 : vector<60x128xf32>
    %c7 = arith.constant 7 : index
    %c0_88 = arith.constant 0 : index
    %c0_89 = arith.constant 0 : index
    %225 = vector.load %arg2[%c7, %c0_88, %c0_89] : memref<9x60x128xf32, #tpu.memory_space<vmem>>, vector<1x60x128xf32>
    %226 = vector.shape_cast %225 : vector<1x60x128xf32> to vector<60x128xf32>
    %227 = arith.subf %226, %224 : vector<60x128xf32>
    %228 = arith.mulf %227, %227 : vector<60x128xf32>
    %229 = arith.addf %208, %228 : vector<60x128xf32>
    %230 = arith.mulf %40, %224 : vector<60x128xf32>
    %cst_90 = arith.constant dense<0.000000e+00> : vector<128xf32>
    %231 = vector.multi_reduction <add>, %230, %cst_90 [0] : vector<60x128xf32> to vector<128xf32>
    %232 = vector.shape_cast %231 : vector<128xf32> to vector<1x128xf32>
    %c7_91 = arith.constant 7 : index
    %c0_92 = arith.constant 0 : index
    %c0_93 = arith.constant 0 : index
    %233 = vector.load %arg5[%c7_91, %c0_92, %c0_93] : memref<9x60x1xf32, #tpu.memory_space<vmem>>, vector<1x60x1xf32>
    %234 = vector.shape_cast %233 : vector<1x60x1xf32> to vector<60x1xf32>
    %235 = vector.broadcast %234 : vector<60x1xf32> to vector<60x128xf32>
    %236 = arith.mulf %40, %235 : vector<60x128xf32>
    %cst_94 = arith.constant dense<0.000000e+00> : vector<128xf32>
    %237 = vector.multi_reduction <add>, %236, %cst_94 [0] : vector<60x128xf32> to vector<128xf32>
    %238 = vector.shape_cast %237 : vector<128xf32> to vector<1x128xf32>
    %239 = arith.mulf %64, %64 : vector<60x128xf32>
    %cst_95 = arith.constant 2.000000e+00 : f32
    %240 = vector.broadcast %cst_95 : f32 to vector<60x128xf32>
    %241 = arith.mulf %240, %239 : vector<60x128xf32>
    %cst_96 = arith.constant 1.000000e+00 : f32
    %242 = vector.broadcast %cst_96 : f32 to vector<60x128xf32>
    %243 = arith.subf %242, %241 : vector<60x128xf32>
    %244 = arith.mulf %65, %65 : vector<60x128xf32>
    %cst_97 = arith.constant 2.000000e+00 : f32
    %245 = vector.broadcast %cst_97 : f32 to vector<60x128xf32>
    %246 = arith.mulf %245, %244 : vector<60x128xf32>
    %247 = arith.subf %243, %246 : vector<60x128xf32>
    %c8 = arith.constant 8 : index
    %c0_98 = arith.constant 0 : index
    %c0_99 = arith.constant 0 : index
    %248 = vector.load %arg2[%c8, %c0_98, %c0_99] : memref<9x60x128xf32, #tpu.memory_space<vmem>>, vector<1x60x128xf32>
    %249 = vector.shape_cast %248 : vector<1x60x128xf32> to vector<60x128xf32>
    %250 = arith.subf %249, %247 : vector<60x128xf32>
    %251 = arith.mulf %250, %250 : vector<60x128xf32>
    %252 = arith.addf %229, %251 : vector<60x128xf32>
    %253 = arith.addf %166, %249 : vector<60x128xf32>
    %254 = arith.mulf %40, %247 : vector<60x128xf32>
    %cst_100 = arith.constant dense<0.000000e+00> : vector<128xf32>
    %255 = vector.multi_reduction <add>, %254, %cst_100 [0] : vector<60x128xf32> to vector<128xf32>
    %256 = vector.shape_cast %255 : vector<128xf32> to vector<1x128xf32>
    %c8_101 = arith.constant 8 : index
    %c0_102 = arith.constant 0 : index
    %c0_103 = arith.constant 0 : index
    %257 = vector.load %arg5[%c8_101, %c0_102, %c0_103] : memref<9x60x1xf32, #tpu.memory_space<vmem>>, vector<1x60x1xf32>
    %258 = vector.shape_cast %257 : vector<1x60x1xf32> to vector<60x1xf32>
    %259 = vector.broadcast %258 : vector<60x1xf32> to vector<60x128xf32>
    %260 = arith.mulf %40, %259 : vector<60x128xf32>
    %cst_104 = arith.constant dense<0.000000e+00> : vector<128xf32>
    %261 = vector.multi_reduction <add>, %260, %cst_104 [0] : vector<60x128xf32> to vector<128xf32>
    %262 = vector.shape_cast %261 : vector<128xf32> to vector<1x128xf32>
    %cst_105 = arith.constant 1.000000e+00 : f32
    %263 = vector.broadcast %cst_105 : f32 to vector<60x128xf32>
    %264 = arith.subf %253, %263 : vector<60x128xf32>
    %cst_106 = arith.constant 5.000000e-01 : f32
    %265 = vector.broadcast %cst_106 : f32 to vector<60x128xf32>
    %266 = arith.mulf %265, %264 : vector<60x128xf32>
    %cst_107 = arith.constant 0.540302277 : f32
    %267 = vector.broadcast %cst_107 : f32 to vector<60x128xf32>
    %268 = arith.cmpf ogt, %266, %267 : vector<60x128xf32>
    %269 = arith.extui %268 : vector<60x128xi1> to vector<60x128xi32>
    %270 = arith.sitofp %269 : vector<60x128xi32> to vector<60x128xf32>
    %271 = vector.broadcast %7 : vector<1x128xf32> to vector<60x128xf32>
    %272 = arith.mulf %270, %271 : vector<60x128xf32>
    %273 = arith.mulf %272, %252 : vector<60x128xf32>
    %cst_108 = arith.constant dense<0.000000e+00> : vector<128xf32>
    %274 = vector.multi_reduction <add>, %273, %cst_108 [0] : vector<60x128xf32> to vector<128xf32>
    %275 = vector.shape_cast %274 : vector<128xf32> to vector<1x128xf32>
    %c0_109 = arith.constant 0 : index
    %c0_110 = arith.constant 0 : index
    %c0_111 = arith.constant 0 : index
    %276 = vector.load %arg4[%c0_109, %c0_110, %c0_111] : memref<10x1x128xf32, #tpu.memory_space<vmem>>, vector<1x1x128xf32>
    %277 = vector.shape_cast %276 : vector<1x1x128xf32> to vector<1x128xf32>
    %c1_112 = arith.constant 1 : index
    %c0_113 = arith.constant 0 : index
    %c0_114 = arith.constant 0 : index
    %278 = vector.load %arg4[%c1_112, %c0_113, %c0_114] : memref<10x1x128xf32, #tpu.memory_space<vmem>>, vector<1x1x128xf32>
    %279 = vector.shape_cast %278 : vector<1x1x128xf32> to vector<1x128xf32>
    %c2_115 = arith.constant 2 : index
    %c0_116 = arith.constant 0 : index
    %c0_117 = arith.constant 0 : index
    %280 = vector.load %arg4[%c2_115, %c0_116, %c0_117] : memref<10x1x128xf32, #tpu.memory_space<vmem>>, vector<1x1x128xf32>
    %281 = vector.shape_cast %280 : vector<1x1x128xf32> to vector<1x128xf32>
    %c3_118 = arith.constant 3 : index
    %c0_119 = arith.constant 0 : index
    %c0_120 = arith.constant 0 : index
    %282 = vector.load %arg4[%c3_118, %c0_119, %c0_120] : memref<10x1x128xf32, #tpu.memory_space<vmem>>, vector<1x1x128xf32>
    %283 = vector.shape_cast %282 : vector<1x1x128xf32> to vector<1x128xf32>
    %c4_121 = arith.constant 4 : index
    %c0_122 = arith.constant 0 : index
    %c0_123 = arith.constant 0 : index
    %284 = vector.load %arg4[%c4_121, %c0_122, %c0_123] : memref<10x1x128xf32, #tpu.memory_space<vmem>>, vector<1x1x128xf32>
    %285 = vector.shape_cast %284 : vector<1x1x128xf32> to vector<1x128xf32>
    %c5_124 = arith.constant 5 : index
    %c0_125 = arith.constant 0 : index
    %c0_126 = arith.constant 0 : index
    %286 = vector.load %arg4[%c5_124, %c0_125, %c0_126] : memref<10x1x128xf32, #tpu.memory_space<vmem>>, vector<1x1x128xf32>
    %287 = vector.shape_cast %286 : vector<1x1x128xf32> to vector<1x128xf32>
    %c6_127 = arith.constant 6 : index
    %c0_128 = arith.constant 0 : index
    %c0_129 = arith.constant 0 : index
    %288 = vector.load %arg4[%c6_127, %c0_128, %c0_129] : memref<10x1x128xf32, #tpu.memory_space<vmem>>, vector<1x1x128xf32>
    %289 = vector.shape_cast %288 : vector<1x1x128xf32> to vector<1x128xf32>
    %c7_130 = arith.constant 7 : index
    %c0_131 = arith.constant 0 : index
    %c0_132 = arith.constant 0 : index
    %290 = vector.load %arg4[%c7_130, %c0_131, %c0_132] : memref<10x1x128xf32, #tpu.memory_space<vmem>>, vector<1x1x128xf32>
    %291 = vector.shape_cast %290 : vector<1x1x128xf32> to vector<1x128xf32>
    %c8_133 = arith.constant 8 : index
    %c0_134 = arith.constant 0 : index
    %c0_135 = arith.constant 0 : index
    %292 = vector.load %arg4[%c8_133, %c0_134, %c0_135] : memref<10x1x128xf32, #tpu.memory_space<vmem>>, vector<1x1x128xf32>
    %293 = vector.shape_cast %292 : vector<1x1x128xf32> to vector<1x128xf32>
    %294 = arith.mulf %88, %277 : vector<1x128xf32>
    %295 = arith.mulf %151, %283 : vector<1x128xf32>
    %296 = arith.addf %294, %295 : vector<1x128xf32>
    %297 = arith.mulf %217, %289 : vector<1x128xf32>
    %298 = arith.addf %296, %297 : vector<1x128xf32>
    %299 = arith.mulf %82, %298 : vector<1x128xf32>
    %300 = arith.mulf %88, %279 : vector<1x128xf32>
    %301 = arith.mulf %151, %285 : vector<1x128xf32>
    %302 = arith.addf %300, %301 : vector<1x128xf32>
    %303 = arith.mulf %217, %291 : vector<1x128xf32>
    %304 = arith.addf %302, %303 : vector<1x128xf32>
    %305 = arith.mulf %103, %304 : vector<1x128xf32>
    %306 = arith.addf %299, %305 : vector<1x128xf32>
    %307 = arith.mulf %88, %281 : vector<1x128xf32>
    %308 = arith.mulf %151, %287 : vector<1x128xf32>
    %309 = arith.addf %307, %308 : vector<1x128xf32>
    %310 = arith.mulf %217, %293 : vector<1x128xf32>
    %311 = arith.addf %309, %310 : vector<1x128xf32>
    %312 = arith.mulf %124, %311 : vector<1x128xf32>
    %313 = arith.addf %306, %312 : vector<1x128xf32>
    %314 = arith.mulf %109, %277 : vector<1x128xf32>
    %315 = arith.mulf %175, %283 : vector<1x128xf32>
    %316 = arith.addf %314, %315 : vector<1x128xf32>
    %317 = arith.mulf %238, %289 : vector<1x128xf32>
    %318 = arith.addf %316, %317 : vector<1x128xf32>
    %319 = arith.mulf %145, %318 : vector<1x128xf32>
    %320 = arith.addf %313, %319 : vector<1x128xf32>
    %321 = arith.mulf %109, %279 : vector<1x128xf32>
    %322 = arith.mulf %175, %285 : vector<1x128xf32>
    %323 = arith.addf %321, %322 : vector<1x128xf32>
    %324 = arith.mulf %238, %291 : vector<1x128xf32>
    %325 = arith.addf %323, %324 : vector<1x128xf32>
    %326 = arith.mulf %169, %325 : vector<1x128xf32>
    %327 = arith.addf %320, %326 : vector<1x128xf32>
    %328 = arith.mulf %109, %281 : vector<1x128xf32>
    %329 = arith.mulf %175, %287 : vector<1x128xf32>
    %330 = arith.addf %328, %329 : vector<1x128xf32>
    %331 = arith.mulf %238, %293 : vector<1x128xf32>
    %332 = arith.addf %330, %331 : vector<1x128xf32>
    %333 = arith.mulf %190, %332 : vector<1x128xf32>
    %334 = arith.addf %327, %333 : vector<1x128xf32>
    %335 = arith.mulf %130, %277 : vector<1x128xf32>
    %336 = arith.mulf %196, %283 : vector<1x128xf32>
    %337 = arith.addf %335, %336 : vector<1x128xf32>
    %338 = arith.mulf %262, %289 : vector<1x128xf32>
    %339 = arith.addf %337, %338 : vector<1x128xf32>
    %340 = arith.mulf %211, %339 : vector<1x128xf32>
    %341 = arith.addf %334, %340 : vector<1x128xf32>
    %342 = arith.mulf %130, %279 : vector<1x128xf32>
    %343 = arith.mulf %196, %285 : vector<1x128xf32>
    %344 = arith.addf %342, %343 : vector<1x128xf32>
    %345 = arith.mulf %262, %291 : vector<1x128xf32>
    %346 = arith.addf %344, %345 : vector<1x128xf32>
    %347 = arith.mulf %232, %346 : vector<1x128xf32>
    %348 = arith.addf %341, %347 : vector<1x128xf32>
    %349 = arith.mulf %130, %281 : vector<1x128xf32>
    %350 = arith.mulf %196, %287 : vector<1x128xf32>
    %351 = arith.addf %349, %350 : vector<1x128xf32>
    %352 = arith.mulf %262, %293 : vector<1x128xf32>
    %353 = arith.addf %351, %352 : vector<1x128xf32>
    %354 = arith.mulf %256, %353 : vector<1x128xf32>
    %355 = arith.addf %348, %354 : vector<1x128xf32>
    %cst_136 = arith.constant 1.000000e+00 : f32
    %356 = vector.broadcast %cst_136 : f32 to vector<1x128xf32>
    %357 = arith.subf %355, %356 : vector<1x128xf32>
    %cst_137 = arith.constant 5.000000e-01 : f32
    %358 = vector.broadcast %cst_137 : f32 to vector<1x128xf32>
    %359 = arith.mulf %358, %357 : vector<1x128xf32>
    %360 = tpu.iota {dimensions = array<i32: 0>} : vector<8x128xi32>
    %c0_i32 = arith.constant 0 : i32
    %361 = vector.broadcast %c0_i32 : i32 to vector<8x128xi32>
    %362 = arith.cmpi eq, %360, %361 : vector<8x128xi32>
    %cst_138 = arith.constant 0.000000e+00 : f32
    %363 = vector.shape_cast %359 : vector<1x128xf32> to vector<1x128xf32>
    %364 = vector.broadcast %363 : vector<1x128xf32> to vector<8x128xf32>
    %365 = vector.broadcast %cst_138 : f32 to vector<8x128xf32>
    %366 = arith.select %362, %364, %365 : vector<8x128xi1>, vector<8x128xf32>
    %c1_i32 = arith.constant 1 : i32
    %367 = vector.broadcast %c1_i32 : i32 to vector<8x128xi32>
    %368 = arith.cmpi eq, %360, %367 : vector<8x128xi32>
    %cst_139 = arith.constant 0.000000e+00 : f32
    %369 = vector.shape_cast %30 : vector<1x128xf32> to vector<1x128xf32>
    %370 = vector.broadcast %369 : vector<1x128xf32> to vector<8x128xf32>
    %371 = vector.broadcast %cst_139 : f32 to vector<8x128xf32>
    %372 = arith.select %368, %370, %371 : vector<8x128xi1>, vector<8x128xf32>
    %373 = arith.addf %366, %372 : vector<8x128xf32>
    %c2_i32_140 = arith.constant 2 : i32
    %374 = vector.broadcast %c2_i32_140 : i32 to vector<8x128xi32>
    %375 = arith.cmpi eq, %360, %374 : vector<8x128xi32>
    %cst_141 = arith.constant 0.000000e+00 : f32
    %376 = vector.shape_cast %44 : vector<1x128xf32> to vector<1x128xf32>
    %377 = vector.broadcast %376 : vector<1x128xf32> to vector<8x128xf32>
    %378 = vector.broadcast %cst_141 : f32 to vector<8x128xf32>
    %379 = arith.select %375, %377, %378 : vector<8x128xi1>, vector<8x128xf32>
    %380 = arith.addf %373, %379 : vector<8x128xf32>
    %c3_i32 = arith.constant 3 : i32
    %381 = vector.broadcast %c3_i32 : i32 to vector<8x128xi32>
    %382 = arith.cmpi eq, %360, %381 : vector<8x128xi32>
    %cst_142 = arith.constant 0.000000e+00 : f32
    %383 = vector.shape_cast %275 : vector<1x128xf32> to vector<1x128xf32>
    %384 = vector.broadcast %383 : vector<1x128xf32> to vector<8x128xf32>
    %385 = vector.broadcast %cst_142 : f32 to vector<8x128xf32>
    %386 = arith.select %382, %384, %385 : vector<8x128xi1>, vector<8x128xf32>
    %387 = arith.addf %380, %386 : vector<8x128xf32>
    %c0_143 = arith.constant 0 : index
    %c0_144 = arith.constant 0 : index
    %388 = vector.load %arg6[%c0_143, %c0_144] : memref<8x128xf32, #tpu.memory_space<vmem>>, vector<8x128xf32>
    tpu.vector_store %arg6[%c0_143, %c0_144], %387 {strides = array<i32>} : memref<8x128xf32, #tpu.memory_space<vmem>>, vector<8x128xf32>,
    return
  }
  func.func @transform_0(%arg0: i32) -> (i32, i32, i32) {
    %c0_i32 = arith.constant 0 : i32
    %c0_i32_0 = arith.constant 0 : i32
    %c0_i32_1 = arith.constant 0 : i32
    return %c0_i32, %c0_i32_0, %arg0 : i32, i32, i32
  }
  func.func @transform_1(%arg0: i32) -> (i32, i32, i32) {
    %c0_i32 = arith.constant 0 : i32
    %c0_i32_0 = arith.constant 0 : i32
    %c0_i32_1 = arith.constant 0 : i32
    return %c0_i32, %c0_i32_0, %arg0 : i32, i32, i32
  }
  func.func @transform_2(%arg0: i32) -> (i32, i32) {
    %c0_i32 = arith.constant 0 : i32
    %c0_i32_0 = arith.constant 0 : i32
    return %c0_i32, %arg0 : i32, i32
  }
  func.func @transform_3(%arg0: i32) -> (i32, i32, i32) {
    %c0_i32 = arith.constant 0 : i32
    %c0_i32_0 = arith.constant 0 : i32
    %c0_i32_1 = arith.constant 0 : i32
    return %c0_i32, %c0_i32_0, %arg0 : i32, i32, i32
  }
  func.func @transform_4(%arg0: i32) -> (i32, i32, i32) {
    %c0_i32 = arith.constant 0 : i32
    %c0_i32_0 = arith.constant 0 : i32
    %c0_i32_1 = arith.constant 0 : i32
    %c0_i32_2 = arith.constant 0 : i32
    return %c0_i32, %c0_i32_0, %c0_i32_1 : i32, i32, i32
  }
  func.func @transform_5(%arg0: i32) -> (i32, i32) {
    %c0_i32 = arith.constant 0 : i32
    %c0_i32_0 = arith.constant 0 : i32
    return %c0_i32, %arg0 : i32, i32
  }
}

</mosaic_0001>

<llo_original>
// kernel: tpu_custom_call.1
$region0: #{tpu_custom_call.1}
  #allocation0 [shape = 'u32[]', space=smem, size = 0x4, offset = 0x4, fixed_abs, tag = 'smem constant byte address 0x4 - core index']
  #allocation1 [shape = 'u32[144,128]{1,0:T(1,128)}', space=vmem, size = 0x12000, scoped, tag = 'internal scratch']
  %s0 = inlined_call_operand.vmem [shape: f32[4,60,128], index: 0, kind: input, shape index: {}]
  %s1 = inlined_call_operand.vmem [shape: f32[9,60,128], index: 1, kind: input, shape index: {}]
  %s2 = inlined_call_operand.vmem [shape: f32[60,128], index: 2, kind: input, shape index: {}]
  %s3 = inlined_call_operand.vmem [shape: f32[10,1,128], index: 3, kind: input, shape index: {}]
  %s4 = inlined_call_operand.vmem [shape: f32[9,60,1], index: 4, kind: input, shape index: {}]
  %s5 = inlined_call_operand.hbm [shape: f32[8,128], index: 5, kind: output, shape index: {}]
  %s6 = sld [smem:[#allocation0]]
  $region30: #{tpu_custom_call.1} parent=0
    _
  %s8 = ssub.s32 1, %s6
  %s9 = scalar_select 0, %s8, %s6
  $region1: #{tpu_custom_call.1} parent=0
    #allocation2 [shape = 'u8[4096]{0}', space=vmem, size = 0x1000, scoped, tag = 'output window, operand 0, single buffered']
    #allocation3 [shape = 's32[1]{0}', space=sflag, size = 0x4, scoped, tag = 'scoped memory for tpu_custom_call.1']
    %10 = vsyncpa [#allocation3], 0
    // Predicated region
    $region2: #{tpu_custom_call.1} parent=1 // pred_check
      _
    $region3: #{tpu_custom_call.1} parent=1 // pred_check_branch
      %12 = sbr.rel (0) target = $region5
    $region4: #{tpu_custom_call.1} parent=1 // pred_region
      _
    $region5: #{tpu_custom_call.1} parent=1 // pred_fallthru
      _
    // Predicated region
    $region6: #{tpu_custom_call.1} parent=1 // pred_check
      _
    $region7: #{tpu_custom_call.1} parent=1 // pred_check_branch
      %14 = sbr.rel (0) target = $region9
    $region8: #{tpu_custom_call.1} parent=1 // pred_region
      _
    $region9: #{tpu_custom_call.1} parent=1 // pred_fallthru
      _
    // Predicated region
    $region10: #{tpu_custom_call.1} parent=1 // pred_check
      _
    $region11: #{tpu_custom_call.1} parent=1 // pred_check_branch
      %16 = sbr.rel (0) target = $region13
    $region12: #{tpu_custom_call.1} parent=1 // pred_region
      _
    $region13: #{tpu_custom_call.1} parent=1 // pred_fallthru
      _
    // Predicated region
    $region14: #{tpu_custom_call.1} parent=1 // pred_check
      _
    $region15: #{tpu_custom_call.1} parent=1 // pred_check_branch
      %18 = sbr.rel (0) target = $region17
    $region16: #{tpu_custom_call.1} parent=1 // pred_region
      _
    $region17: #{tpu_custom_call.1} parent=1 // pred_fallthru
      _
    // Predicated region
    $region18: #{tpu_custom_call.1} parent=1 // pred_check
      _
    $region19: #{tpu_custom_call.1} parent=1 // pred_check_branch
      %20 = sbr.rel (0) target = $region21
    $region20: #{tpu_custom_call.1} parent=1 // pred_region
      _
    $region21: #{tpu_custom_call.1} parent=1 // pred_fallthru
      _
    %v21 = vlaneseq
    %v22 = vand.u32 %v21, 127
    %s23 = smul.u32 0, 128
    %v24 = vstv %s23
    %v25 = vadd.s32 %v24, %v22
    %vm26 = vcmp.lt.s32.totalorder %v25, 2
    %v27 = vsel %vm26, 1, 0
    %v28 = vcvt.s32.f32 %v27
    %v29 = vlaneseq
    %v30 = vshrl.u32 %v29, 7
    %v31 = vadd.s32 %v30, 8
    %v32 = vadd.s32 %v30, 16
    %v33 = vadd.s32 %v30, 24
    %v34 = vadd.s32 %v30, 32
    %v35 = vadd.s32 %v30, 40
    %v36 = vadd.s32 %v30, 48
    %v37 = vadd.s32 %v30, 56
    %v38 = vcvt.s32.f32 %v30
    %v39 = vcvt.s32.f32 %v31
    %v40 = vcvt.s32.f32 %v32
    %v41 = vcvt.s32.f32 %v33
    %v42 = vcvt.s32.f32 %v34
    %v43 = vcvt.s32.f32 %v35
    %v44 = vcvt.s32.f32 %v36
    %v45 = vcvt.s32.f32 %v37
    %v46 = vld [vmem:[%s2] sm:$0xff]
    %v47 = vld [vmem:[%s2 + $0x8] sm:$0xff]
    %v48 = vld [vmem:[%s2 + $0x10] sm:$0xff]
    %v49 = vld [vmem:[%s2 + $0x18] sm:$0xff]
    %v50 = vld [vmem:[%s2 + $0x20] sm:$0xff]
    %v51 = vld [vmem:[%s2 + $0x28] sm:$0xff]
    %v52 = vld [vmem:[%s2 + $0x30] sm:$0xff]
    %v53 = vld [vmem:[%s2 + $0x38] sm:$0xf]
    %s54 = scalar_lea.vmem %s3, 9
    %v55 = vld [vmem:[%s54] sm:$0x1]
    %v56 = vmax.f32 %v46, %v50
    %v57 = vmax.f32 %v47, %v51
    %v58 = vmax.f32 %v48, %v52
    %vm59 = vcmask 1043456
    %v60 = vsel %vm59, %v53, -inf
    %v61 = vmax.f32 %v49, %v60
    %v62 = vmax.f32 %v56, %v57
    %v63 = vmax.f32 %v58, %v61
    %v64 = vmax.f32 %v62, %v63
    %v65 = vrot.slane %v64, 4
    %v66 = vmax.f32 %v64, %v65
    %v67 = vrot.slane %v66, 2
    %v68 = vmax.f32 %v66, %v67
    %v69 = vrot.slane %v68, 1
    %v70 = vmax.f32 %v68, %v69
    %v71 = vsub.f32 %v46, %v70
    %v72 = vsub.f32 %v47, %v70
    %v73 = vsub.f32 %v48, %v70
    %v74 = vsub.f32 %v49, %v70
    %v75 = vsub.f32 %v50, %v70
    %v76 = vsub.f32 %v51, %v70
    %v77 = vsub.f32 %v52, %v70
    %v78 = vsub.f32 %v53, %v70
    %v79 = vmul.f32 %v71, 1.442695
    %v80 = vpow.pop %v79
    %v81 = vmul.f32 %v72, 1.442695
    %v82 = vpow.pop %v81
    %v83 = vmul.f32 %v73, 1.442695
    %v84 = vpow.pop %v83
    %v85 = vmul.f32 %v74, 1.442695
    %v86 = vpow.pop %v85
    %v87 = vmul.f32 %v75, 1.442695
    %v88 = vpow.pop %v87
    %v89 = vmul.f32 %v76, 1.442695
    %v90 = vpow.pop %v89
    %v91 = vmul.f32 %v77, 1.442695
    %v92 = vpow.pop %v91
    %v93 = vmul.f32 %v78, 1.442695
    %v94 = vpow.pop %v93
    %v95 = vadd.f32 %v80, %v82
    %v96 = vadd.f32 %v95, %v84
    %v97 = vadd.f32 %v96, %v86
    %v98 = vadd.f32 %v97, %v88
    %v99 = vadd.f32 %v98, %v90
    %v100 = vadd.f32 %v99, %v92
    %v101 = vsel %vm59, %v94, 0.0
    %v102 = vadd.f32 %v100, %v101
    %v103 = vrot.slane %v102, 4
    %v104 = vadd.f32 %v102, %v103
    %v105 = vrot.slane %v104, 2
    %v106 = vadd.f32 %v104, %v105
    %v107 = vrot.slane %v106, 1
    %v108 = vadd.f32 %v106, %v107
    %v109 = vlog2.pop %v108
    %v110 = vmul.f32 %v109, 0.6931472
    %v111 = vadd.f32 %v110, %v70
    %v113 = vlaneseq
    %v114 = vshrl.u32 %v113, 7
    %v115 = vsub.s32 0, %v114
    %v116 = vrot.slane %v55, %v115
    %vm118 = vcmp.eq.f32.partialorder %v38, %v116
    %vm119 = vcmp.eq.f32.partialorder %v39, %v116
    %vm120 = vcmp.eq.f32.partialorder %v40, %v116
    %vm121 = vcmp.eq.f32.partialorder %v41, %v116
    %vm122 = vcmp.eq.f32.partialorder %v42, %v116
    %vm123 = vcmp.eq.f32.partialorder %v43, %v116
    %vm124 = vcmp.eq.f32.partialorder %v44, %v116
    %vm125 = vcmp.eq.f32.partialorder %v45, %v116
    %v126 = vsel %vm118, 1, 0
    %v127 = vsel %vm119, 1, 0
    %v128 = vsel %vm120, 1, 0
    %v129 = vsel %vm121, 1, 0
    %v130 = vsel %vm122, 1, 0
    %v131 = vsel %vm123, 1, 0
    %v132 = vsel %vm124, 1, 0
    %v133 = vsel %vm125, 1, 0
    %v134 = vcvt.s32.f32 %v126
    %v135 = vcvt.s32.f32 %v127
    %v136 = vcvt.s32.f32 %v128
    %v137 = vcvt.s32.f32 %v129
    %v138 = vcvt.s32.f32 %v130
    %v139 = vcvt.s32.f32 %v131
    %v140 = vcvt.s32.f32 %v132
    %v141 = vcvt.s32.f32 %v133
    %v142 = vmul.f32 %v134, %v46
    %v143 = vmul.f32 %v135, %v47
    %v144 = vmul.f32 %v136, %v48
    %v145 = vmul.f32 %v137, %v49
    %v146 = vmul.f32 %v138, %v50
    %v147 = vmul.f32 %v139, %v51
    %v148 = vmul.f32 %v140, %v52
    %v149 = vmul.f32 %v141, %v53
    %v150 = vadd.f32 %v142, %v143
    %v151 = vadd.f32 %v150, %v144
    %v152 = vadd.f32 %v151, %v145
    %v153 = vadd.f32 %v152, %v146
    %v154 = vadd.f32 %v153, %v147
    %v155 = vadd.f32 %v154, %v148
    %v156 = vsel %vm59, %v149, 0.0
    %v157 = vadd.f32 %v155, %v156
    %v158 = vrot.slane %v157, 4
    %v159 = vadd.f32 %v157, %v158
    %v160 = vrot.slane %v159, 2
    %v161 = vadd.f32 %v159, %v160
    %v162 = vrot.slane %v161, 1
    %v163 = vadd.f32 %v161, %v162
    %v164 = vsub.f32 %v111, %v163
    %v165 = vmul.f32 %v28, %v164
    %vm166 = vcmp.eq.f32.partialorder %v46, %v70
    %vm167 = vcmp.eq.f32.partialorder %v47, %v70
    %vm168 = vcmp.eq.f32.partialorder %v48, %v70
    %vm169 = vcmp.eq.f32.partialorder %v49, %v70
    %vm170 = vcmp.eq.f32.partialorder %v50, %v70
    %vm171 = vcmp.eq.f32.partialorder %v51, %v70
    %vm172 = vcmp.eq.f32.partialorder %v52, %v70
    %vm173 = vcmp.eq.f32.partialorder %v53, %v70
    %v174 = vsel %vm166, %v38, 60.0
    %v175 = vsel %vm167, %v39, 60.0
    %v176 = vsel %vm168, %v40, 60.0
    %v177 = vsel %vm169, %v41, 60.0
    %v178 = vsel %vm170, %v42, 60.0
    %v179 = vsel %vm171, %v43, 60.0
    %v180 = vsel %vm172, %v44, 60.0
    %v181 = vsel %vm173, %v45, 60.0
    %v182 = vmin.f32 %v174, %v178
    %v183 = vmin.f32 %v175, %v179
    %v184 = vmin.f32 %v176, %v180
    %v185 = vsel %vm59, %v181, inf
    %v186 = vmin.f32 %v177, %v185
    %v187 = vmin.f32 %v182, %v183
    %v188 = vmin.f32 %v184, %v186
    %v189 = vmin.f32 %v187, %v188
    %v190 = vrot.slane %v189, 4
    %v191 = vmin.f32 %v189, %v190
    %v192 = vrot.slane %v191, 2
    %v193 = vmin.f32 %v191, %v192
    %v194 = vrot.slane %v193, 1
    %v195 = vmin.f32 %v193, %v194
    %vm196 = vcmp.eq.f32.partialorder %v38, %v195
    %vm197 = vcmp.eq.f32.partialorder %v39, %v195
    %vm198 = vcmp.eq.f32.partialorder %v40, %v195
    %vm199 = vcmp.eq.f32.partialorder %v41, %v195
    %vm200 = vcmp.eq.f32.partialorder %v42, %v195
    %vm201 = vcmp.eq.f32.partialorder %v43, %v195
    %vm202 = vcmp.eq.f32.partialorder %v44, %v195
    %vm203 = vcmp.eq.f32.partialorder %v45, %v195
    %v204 = vsel %vm196, 1, 0
    %v205 = vsel %vm197, 1, 0
    %v206 = vsel %vm198, 1, 0
    %v207 = vsel %vm199, 1, 0
    %v208 = vsel %vm200, 1, 0
    %v209 = vsel %vm201, 1, 0
    %v210 = vsel %vm202, 1, 0
    %v211 = vsel %vm203, 1, 0
    %v212 = vcvt.s32.f32 %v204
    %v213 = vcvt.s32.f32 %v205
    %v214 = vcvt.s32.f32 %v206
    %v215 = vcvt.s32.f32 %v207
    %v216 = vcvt.s32.f32 %v208
    %v217 = vcvt.s32.f32 %v209
    %v218 = vcvt.s32.f32 %v210
    %v219 = vcvt.s32.f32 %v211
    %vm220 = vcmp.eq.f32.partialorder %v195, %v55
    %v221 = vsel %vm220, 1, 0
    %v222 = vcvt.s32.f32 %v221
    %v223 = vmul.f32 %v28, %v222
    %v224 = vld [vmem:[%s0] sm:$0xff]
    %v225 = vld [vmem:[%s0 + $0x8] sm:$0xff]
    %v226 = vld [vmem:[%s0 + $0x10] sm:$0xff]
    %v227 = vld [vmem:[%s0 + $0x18] sm:$0xff]
    %v228 = vld [vmem:[%s0 + $0x20] sm:$0xff]
    %v229 = vld [vmem:[%s0 + $0x28] sm:$0xff]
    %v230 = vld [vmem:[%s0 + $0x30] sm:$0xff]
    %v231 = vld [vmem:[%s0 + $0x38] sm:$0xf]
    %s232 = scalar_lea.vmem %s0, 64
    %v233 = vld [vmem:[%s232] sm:$0xff]
    %v234 = vld [vmem:[%s232 + $0x8] sm:$0xff]
    %v235 = vld [vmem:[%s232 + $0x10] sm:$0xff]
    %v236 = vld [vmem:[%s232 + $0x18] sm:$0xff]
    %v237 = vld [vmem:[%s232 + $0x20] sm:$0xff]
    %v238 = vld [vmem:[%s232 + $0x28] sm:$0xff]
    %v239 = vld [vmem:[%s232 + $0x30] sm:$0xff]
    %v240 = vld [vmem:[%s232 + $0x38] sm:$0xf]
    %s241 = scalar_lea.vmem %s0, 128
    %v242 = vld [vmem:[%s241] sm:$0xff]
    %v243 = vld [vmem:[%s241 + $0x8] sm:$0xff]
    %v244 = vld [vmem:[%s241 + $0x10] sm:$0xff]
    %v245 = vld [vmem:[%s241 + $0x18] sm:$0xff]
    %v246 = vld [vmem:[%s241 + $0x20] sm:$0xff]
    %v247 = vld [vmem:[%s241 + $0x28] sm:$0xff]
    %v248 = vld [vmem:[%s241 + $0x30] sm:$0xff]
    %v249 = vld [vmem:[%s241 + $0x38] sm:$0xf]
    %s250 = scalar_lea.vmem %s0, 192
    %v251 = vld [vmem:[%s250] sm:$0xff]
    %v252 = vld [vmem:[%s250 + $0x8] sm:$0xff]
    %v253 = vld [vmem:[%s250 + $0x10] sm:$0xff]
    %v254 = vld [vmem:[%s250 + $0x18] sm:$0xff]
    %v255 = vld [vmem:[%s250 + $0x20] sm:$0xff]
    %v256 = vld [vmem:[%s250 + $0x28] sm:$0xff]
    %v257 = vld [vmem:[%s250 + $0x30] sm:$0xff]
    %v258 = vld [vmem:[%s250 + $0x38] sm:$0xf]
    %v259 = vmul.f32 %v224, %v224
    %v260 = vmul.f32 %v225, %v225
    %v261 = vmul.f32 %v226, %v226
    %v262 = vmul.f32 %v227, %v227
    %v263 = vmul.f32 %v228, %v228
    %v264 = vmul.f32 %v229, %v229
    %v265 = vmul.f32 %v230, %v230
    %v266 = vmul.f32 %v231, %v231
    %v267 = vmul.f32 %v233, %v233
    %v268 = vmul.f32 %v234, %v234
    %v269 = vmul.f32 %v235, %v235
    %v270 = vmul.f32 %v236, %v236
    %v271 = vmul.f32 %v237, %v237
    %v272 = vmul.f32 %v238, %v238
    %v273 = vmul.f32 %v239, %v239
    %v274 = vmul.f32 %v240, %v240
    %v275 = vadd.f32 %v259, %v267
    %v276 = vadd.f32 %v260, %v268
    %v277 = vadd.f32 %v261, %v269
    %v278 = vadd.f32 %v262, %v270
    %v279 = vadd.f32 %v263, %v271
    %v280 = vadd.f32 %v264, %v272
    %v281 = vadd.f32 %v265, %v273
    %v282 = vadd.f32 %v266, %v274
    %v283 = vmul.f32 %v242, %v242
    %v284 = vmul.f32 %v243, %v243
    %v285 = vmul.f32 %v244, %v244
    %v286 = vmul.f32 %v245, %v245
    %v287 = vmul.f32 %v246, %v246
    %v288 = vmul.f32 %v247, %v247
    %v289 = vmul.f32 %v248, %v248
    %v290 = vmul.f32 %v249, %v249
    %v291 = vadd.f32 %v275, %v283
    %v292 = vadd.f32 %v276, %v284
    %v293 = vadd.f32 %v277, %v285
    %v294 = vadd.f32 %v278, %v286
    %v295 = vadd.f32 %v279, %v287
    %v296 = vadd.f32 %v280, %v288
    %v297 = vadd.f32 %v281, %v289
    %v298 = vadd.f32 %v282, %v290
    %v299 = vmul.f32 %v251, %v251
    %v300 = vmul.f32 %v252, %v252
    %v301 = vmul.f32 %v253, %v253
    %v302 = vmul.f32 %v254, %v254
    %v303 = vmul.f32 %v255, %v255
    %v304 = vmul.f32 %v256, %v256
    %v305 = vmul.f32 %v257, %v257
    %v306 = vmul.f32 %v258, %v258
    %v307 = vadd.f32 %v291, %v299
    %v308 = vadd.f32 %v292, %v300
    %v309 = vadd.f32 %v293, %v301
    %v310 = vadd.f32 %v294, %v302
    %v311 = vadd.f32 %v295, %v303
    %v312 = vadd.f32 %v296, %v304
    %v313 = vadd.f32 %v297, %v305
    %v314 = vadd.f32 %v298, %v306
    %v315 = vmax.f32 %v307, 1e-16
    %v316 = vmax.f32 %v308, 1e-16
    %v317 = vmax.f32 %v309, 1e-16
    %v318 = vmax.f32 %v310, 1e-16
    %v319 = vmax.f32 %v311, 1e-16
    %v320 = vmax.f32 %v312, 1e-16
    %v321 = vmax.f32 %v313, 1e-16
    %v322 = vmax.f32 %v314, 1e-16
    %v323 = vrsqrt.pop %v315
    %v324 = vrsqrt.pop %v316
    %v325 = vrsqrt.pop %v317
    %v326 = vrsqrt.pop %v318
    %v327 = vrsqrt.pop %v319
    %v328 = vrsqrt.pop %v320
    %v329 = vrsqrt.pop %v321
    %v330 = vrsqrt.pop %v322
    %v331 = vmul.f32 %v224, %v323
    %v332 = vmul.f32 %v225, %v324
    %v333 = vmul.f32 %v226, %v325
    %v334 = vmul.f32 %v227, %v326
    %v335 = vmul.f32 %v228, %v327
    %v336 = vmul.f32 %v229, %v328
    %v337 = vmul.f32 %v230, %v329
    %v338 = vmul.f32 %v231, %v330
    %v339 = vmul.f32 %v233, %v323
    %v340 = vmul.f32 %v234, %v324
    %v341 = vmul.f32 %v235, %v325
    %v342 = vmul.f32 %v236, %v326
    %v343 = vmul.f32 %v237, %v327
    %v344 = vmul.f32 %v238, %v328
    %v345 = vmul.f32 %v239, %v329
    %v346 = vmul.f32 %v240, %v330
    %v347 = vmul.f32 %v242, %v323
    %v348 = vmul.f32 %v243, %v324
    %v349 = vmul.f32 %v244, %v325
    %v350 = vmul.f32 %v245, %v326
    %v351 = vmul.f32 %v246, %v327
    %v352 = vmul.f32 %v247, %v328
    %v353 = vmul.f32 %v248, %v329
    %v354 = vmul.f32 %v249, %v330
    %v355 = vmul.f32 %v251, %v323
    %v356 = vmul.f32 %v252, %v324
    %v357 = vmul.f32 %v253, %v325
    %v358 = vmul.f32 %v254, %v326
    %v359 = vmul.f32 %v255, %v327
    %v360 = vmul.f32 %v256, %v328
    %v361 = vmul.f32 %v257, %v329
    %v362 = vmul.f32 %v258, %v330
    %v363 = vmul.f32 %v347, %v347
    %v364 = vmul.f32 %v348, %v348
    %v365 = vmul.f32 %v349, %v349
    %v366 = vmul.f32 %v350, %v350
    %v367 = vmul.f32 %v351, %v351
    %v368 = vmul.f32 %v352, %v352
    %v369 = vmul.f32 %v353, %v353
    %v370 = vmul.f32 %v354, %v354
    %v371 = vmul.f32 %v363, 2.0
    %v372 = vmul.f32 %v364, 2.0
    %v373 = vmul.f32 %v365, 2.0
    %v374 = vmul.f32 %v366, 2.0
    %v375 = vmul.f32 %v367, 2.0
    %v376 = vmul.f32 %v368, 2.0
    %v377 = vmul.f32 %v369, 2.0
    %v378 = vmul.f32 %v370, 2.0
    %v379 = vsub.f32 1.0, %v371
    %v380 = vsub.f32 1.0, %v372
    %v381 = vsub.f32 1.0, %v373
    %v382 = vsub.f32 1.0, %v374
    %v383 = vsub.f32 1.0, %v375
    %v384 = vsub.f32 1.0, %v376
    %v385 = vsub.f32 1.0, %v377
    %v386 = vsub.f32 1.0, %v378
    %v387 = vmul.f32 %v355, %v355
    %v388 = vmul.f32 %v356, %v356
    %v389 = vmul.f32 %v357, %v357
    %v390 = vmul.f32 %v358, %v358
    %v391 = vmul.f32 %v359, %v359
    %v392 = vmul.f32 %v360, %v360
    %v393 = vmul.f32 %v361, %v361
    %v394 = vmul.f32 %v362, %v362
    %v395 = vmul.f32 %v387, 2.0
    %v396 = vmul.f32 %v388, 2.0
    %v397 = vmul.f32 %v389, 2.0
    %v398 = vmul.f32 %v390, 2.0
    %v399 = vmul.f32 %v391, 2.0
    %v400 = vmul.f32 %v392, 2.0
    %v401 = vmul.f32 %v393, 2.0
    %v402 = vmul.f32 %v394, 2.0
    %v403 = vsub.f32 %v379, %v395
    %v404 = vsub.f32 %v380, %v396
    %v405 = vsub.f32 %v381, %v397
    %v406 = vsub.f32 %v382, %v398
    %v407 = vsub.f32 %v383, %v399
    %v408 = vsub.f32 %v384, %v400
    %v409 = vsub.f32 %v385, %v401
    %v410 = vsub.f32 %v386, %v402
    %v411 = vld [vmem:[%s1] sm:$0xff]
    %v412 = vld [vmem:[%s1 + $0x8] sm:$0xff]
    %v413 = vld [vmem:[%s1 + $0x10] sm:$0xff]
    %v414 = vld [vmem:[%s1 + $0x18] sm:$0xff]
    %v415 = vld [vmem:[%s1 + $0x20] sm:$0xff]
    %v416 = vld [vmem:[%s1 + $0x28] sm:$0xff]
    %v417 = vld [vmem:[%s1 + $0x30] sm:$0xff]
    %v418 = vld [vmem:[%s1 + $0x38] sm:$0xf]
    %v419 = vsub.f32 %v411, %v403
    %v420 = vsub.f32 %v412, %v404
    %v421 = vsub.f32 %v413, %v405
    %v422 = vsub.f32 %v414, %v406
    %v423 = vsub.f32 %v415, %v407
    %v424 = vsub.f32 %v416, %v408
    %v425 = vsub.f32 %v417, %v409
    %v426 = vsub.f32 %v418, %v410
    %v427 = vmul.f32 %v419, %v419
    %v428 = vmul.f32 %v420, %v420
    %v429 = vmul.f32 %v421, %v421
    %v430 = vmul.f32 %v422, %v422
    %v431 = vmul.f32 %v423, %v423
    %v432 = vmul.f32 %v424, %v424
    %v433 = vmul.f32 %v425, %v425
    %v434 = vmul.f32 %v426, %v426
    %v435 = vmul.f32 %v212, %v403
    %v436 = vmul.f32 %v213, %v404
    %v437 = vmul.f32 %v214, %v405
    %v438 = vmul.f32 %v215, %v406
    %v439 = vmul.f32 %v216, %v407
    %v440 = vmul.f32 %v217, %v408
    %v441 = vmul.f32 %v218, %v409
    %v442 = vmul.f32 %v219, %v410
    %v443 = vadd.f32 %v435, %v436
    %v444 = vadd.f32 %v443, %v437
    %v445 = vadd.f32 %v444, %v438
    %v446 = vadd.f32 %v445, %v439
    %v447 = vadd.f32 %v446, %v440
    %v448 = vadd.f32 %v447, %v441
    %v449 = vsel %vm59, %v442, 0.0
    %v450 = vadd.f32 %v448, %v449
    %v451 = vrot.slane %v450, 4
    %v452 = vadd.f32 %v450, %v451
    %v453 = vrot.slane %v452, 2
    %v454 = vadd.f32 %v452, %v453
    %v455 = vrot.slane %v454, 1
    %v456 = vadd.f32 %v454, %v455
    %v457 = vld [vmem:[%s4] sm:$0xff]
    %v458 = vld [vmem:[%s4 + $0x8] sm:$0xff]
    %v459 = vld [vmem:[%s4 + $0x10] sm:$0xff]
    %v460 = vld [vmem:[%s4 + $0x18] sm:$0xff]
    %v461 = vld [vmem:[%s4 + $0x20] sm:$0xff]
    %v462 = vld [vmem:[%s4 + $0x28] sm:$0xff]
    %v463 = vld [vmem:[%s4 + $0x30] sm:$0xff]
    %v464 = vld [vmem:[%s4 + $0x38] sm:$0xf]
    %466 = vset.pattern.permute.xlu0 0
    %467 = vperm.xlu0 %466, %v457
    %v468 = vpop.permute.xlu0 %467
    %471 = vset.pattern.permute.xlu0 0
    %472 = vperm.xlu0 %471, %v458
    %v473 = vpop.permute.xlu0 %472
    %476 = vset.pattern.permute.xlu0 0
    %477 = vperm.xlu0 %476, %v459
    %v478 = vpop.permute.xlu0 %477
    %481 = vset.pattern.permute.xlu0 0
    %482 = vperm.xlu0 %481, %v460
    %v483 = vpop.permute.xlu0 %482
    %486 = vset.pattern.permute.xlu0 0
    %487 = vperm.xlu0 %486, %v461
    %v488 = vpop.permute.xlu0 %487
    %491 = vset.pattern.permute.xlu0 0
    %492 = vperm.xlu0 %491, %v462
    %v493 = vpop.permute.xlu0 %492
    %496 = vset.pattern.permute.xlu0 0
    %497 = vperm.xlu0 %496, %v463
    %v498 = vpop.permute.xlu0 %497
    %501 = vset.pattern.permute.xlu0 0
    %502 = vperm.xlu0 %501, %v464
    %v503 = vpop.permute.xlu0 %502
    %v505 = vmul.f32 %v212, %v468
    %v506 = vmul.f32 %v213, %v473
    %v507 = vmul.f32 %v214, %v478
    %v508 = vmul.f32 %v215, %v483
    %v509 = vmul.f32 %v216, %v488
    %v510 = vmul.f32 %v217, %v493
    %v511 = vmul.f32 %v218, %v498
    %v512 = vmul.f32 %v219, %v503
    %v513 = vadd.f32 %v505, %v506
    %v514 = vadd.f32 %v513, %v507
    %v515 = vadd.f32 %v514, %v508
    %v516 = vadd.f32 %v515, %v509
    %v517 = vadd.f32 %v516, %v510
    %v518 = vadd.f32 %v517, %v511
    %v519 = vsel %vm59, %v512, 0.0
    %v520 = vadd.f32 %v518, %v519
    %v521 = vrot.slane %v520, 4
    %v522 = vadd.f32 %v520, %v521
    %v523 = vrot.slane %v522, 2
    %v524 = vadd.f32 %v522, %v523
    %v525 = vrot.slane %v524, 1
    %v526 = vadd.f32 %v524, %v525
    %v527 = vmul.f32 %v339, %v347
    %v528 = vmul.f32 %v340, %v348
    %v529 = vmul.f32 %v341, %v349
    %v530 = vmul.f32 %v342, %v350
    %v531 = vmul.f32 %v343, %v351
    %v532 = vmul.f32 %v344, %v352
    %v533 = vmul.f32 %v345, %v353
    %v534 = vmul.f32 %v346, %v354
    %v535 = vmul.f32 %v527, 2.0
    %v536 = vmul.f32 %v528, 2.0
    %v537 = vmul.f32 %v529, 2.0
    %v538 = vmul.f32 %v530, 2.0
    %v539 = vmul.f32 %v531, 2.0
    %v540 = vmul.f32 %v532, 2.0
    %v541 = vmul.f32 %v533, 2.0
    %v542 = vmul.f32 %v534, 2.0
    %v543 = vmul.f32 %v355, %v331
    %v544 = vmul.f32 %v356, %v332
    %v545 = vmul.f32 %v357, %v333
    %v546 = vmul.f32 %v358, %v334
    %v547 = vmul.f32 %v359, %v335
    %v548 = vmul.f32 %v360, %v336
    %v549 = vmul.f32 %v361, %v337
    %v550 = vmul.f32 %v362, %v338
    %v551 = vmul.f32 %v543, 2.0
    %v552 = vmul.f32 %v544, 2.0
    %v553 = vmul.f32 %v545, 2.0
    %v554 = vmul.f32 %v546, 2.0
    %v555 = vmul.f32 %v547, 2.0
    %v556 = vmul.f32 %v548, 2.0
    %v557 = vmul.f32 %v549, 2.0
    %v558 = vmul.f32 %v550, 2.0
    %v559 = vsub.f32 %v535, %v551
    %v560 = vsub.f32 %v536, %v552
    %v561 = vsub.f32 %v537, %v553
    %v562 = vsub.f32 %v538, %v554
    %v563 = vsub.f32 %v539, %v555
    %v564 = vsub.f32 %v540, %v556
    %v565 = vsub.f32 %v541, %v557
    %v566 = vsub.f32 %v542, %v558
    %s567 = scalar_lea.vmem %s1, 64
    %v568 = vld [vmem:[%s567] sm:$0xff]
    %v569 = vld [vmem:[%s567 + $0x8] sm:$0xff]
    %v570 = vld [vmem:[%s567 + $0x10] sm:$0xff]
    %v571 = vld [vmem:[%s567 + $0x18] sm:$0xff]
    %v572 = vld [vmem:[%s567 + $0x20] sm:$0xff]
    %v573 = vld [vmem:[%s567 + $0x28] sm:$0xff]
    %v574 = vld [vmem:[%s567 + $0x30] sm:$0xff]
    %v575 = vld [vmem:[%s567 + $0x38] sm:$0xf]
    %v576 = vsub.f32 %v568, %v559
    %v577 = vsub.f32 %v569, %v560
    %v578 = vsub.f32 %v570, %v561
    %v579 = vsub.f32 %v571, %v562
    %v580 = vsub.f32 %v572, %v563
    %v581 = vsub.f32 %v573, %v564
    %v582 = vsub.f32 %v574, %v565
    %v583 = vsub.f32 %v575, %v566
    %v584 = vmul.f32 %v576, %v576
    %v585 = vmul.f32 %v577, %v577
    %v586 = vmul.f32 %v578, %v578
    %v587 = vmul.f32 %v579, %v579
    %v588 = vmul.f32 %v580, %v580
    %v589 = vmul.f32 %v581, %v581
    %v590 = vmul.f32 %v582, %v582
    %v591 = vmul.f32 %v583, %v583
    %v592 = vadd.f32 %v427, %v584
    %v593 = vadd.f32 %v428, %v585
    %v594 = vadd.f32 %v429, %v586
    %v595 = vadd.f32 %v430, %v587
    %v596 = vadd.f32 %v431, %v588
    %v597 = vadd.f32 %v432, %v589
    %v598 = vadd.f32 %v433, %v590
    %v599 = vadd.f32 %v434, %v591
    %v600 = vmul.f32 %v212, %v559
    %v601 = vmul.f32 %v213, %v560
    %v602 = vmul.f32 %v214, %v561
    %v603 = vmul.f32 %v215, %v562
    %v604 = vmul.f32 %v216, %v563
    %v605 = vmul.f32 %v217, %v564
    %v606 = vmul.f32 %v218, %v565
    %v607 = vmul.f32 %v219, %v566
    %v608 = vadd.f32 %v600, %v601
    %v609 = vadd.f32 %v608, %v602
    %v610 = vadd.f32 %v609, %v603
    %v611 = vadd.f32 %v610, %v604
    %v612 = vadd.f32 %v611, %v605
    %v613 = vadd.f32 %v612, %v606
    %v614 = vsel %vm59, %v607, 0.0
    %v615 = vadd.f32 %v613, %v614
    %v616 = vrot.slane %v615, 4
    %v617 = vadd.f32 %v615, %v616
    %v618 = vrot.slane %v617, 2
    %v619 = vadd.f32 %v617, %v618
    %v620 = vrot.slane %v619, 1
    %v621 = vadd.f32 %v619, %v620
    %s622 = scalar_lea.vmem %s4, 64
    %v623 = vld [vmem:[%s622] sm:$0xff]
    %v624 = vld [vmem:[%s622 + $0x8] sm:$0xff]
    %v625 = vld [vmem:[%s622 + $0x10] sm:$0xff]
    %v626 = vld [vmem:[%s622 + $0x18] sm:$0xff]
    %v627 = vld [vmem:[%s622 + $0x20] sm:$0xff]
    %v628 = vld [vmem:[%s622 + $0x28] sm:$0xff]
    %v629 = vld [vmem:[%s622 + $0x30] sm:$0xff]
    %v630 = vld [vmem:[%s622 + $0x38] sm:$0xf]
    %632 = vset.pattern.permute.xlu0 0
    %633 = vperm.xlu0 %632, %v623
    %v634 = vpop.permute.xlu0 %633
    %637 = vset.pattern.permute.xlu0 0
    %638 = vperm.xlu0 %637, %v624
    %v639 = vpop.permute.xlu0 %638
    %642 = vset.pattern.permute.xlu0 0
    %643 = vperm.xlu0 %642, %v625
    %v644 = vpop.permute.xlu0 %643
    %647 = vset.pattern.permute.xlu0 0
    %648 = vperm.xlu0 %647, %v626
    %v649 = vpop.permute.xlu0 %648
    %652 = vset.pattern.permute.xlu0 0
    %653 = vperm.xlu0 %652, %v627
    %v654 = vpop.permute.xlu0 %653
    %657 = vset.pattern.permute.xlu0 0
    %658 = vperm.xlu0 %657, %v628
    %v659 = vpop.permute.xlu0 %658
    %662 = vset.pattern.permute.xlu0 0
    %663 = vperm.xlu0 %662, %v629
    %v664 = vpop.permute.xlu0 %663
    %667 = vset.pattern.permute.xlu0 0
    %668 = vperm.xlu0 %667, %v630
    %v669 = vpop.permute.xlu0 %668
    %v671 = vmul.f32 %v212, %v634
    %v672 = vmul.f32 %v213, %v639
    %v673 = vmul.f32 %v214, %v644
    %v674 = vmul.f32 %v215, %v649
    %v675 = vmul.f32 %v216, %v654
    %v676 = vmul.f32 %v217, %v659
    %v677 = vmul.f32 %v218, %v664
    %v678 = vmul.f32 %v219, %v669
    %v679 = vadd.f32 %v671, %v672
    %v680 = vadd.f32 %v679, %v673
    %v681 = vadd.f32 %v680, %v674
    %v682 = vadd.f32 %v681, %v675
    %v683 = vadd.f32 %v682, %v676
    %v684 = vadd.f32 %v683, %v677
    %v685 = vsel %vm59, %v678, 0.0
    %v686 = vadd.f32 %v684, %v685
    %v687 = vrot.slane %v686, 4
    %v688 = vadd.f32 %v686, %v687
    %v689 = vrot.slane %v688, 2
    %v690 = vadd.f32 %v688, %v689
    %v691 = vrot.slane %v690, 1
    %v692 = vadd.f32 %v690, %v691
    %v693 = vmul.f32 %v339, %v355
    %v694 = vmul.f32 %v340, %v356
    %v695 = vmul.f32 %v341, %v357
    %v696 = vmul.f32 %v342, %v358
    %v697 = vmul.f32 %v343, %v359
    %v698 = vmul.f32 %v344, %v360
    %v699 = vmul.f32 %v345, %v361
    %v700 = vmul.f32 %v346, %v362
    %v701 = vmul.f32 %v693, 2.0
    %v702 = vmul.f32 %v694, 2.0
    %v703 = vmul.f32 %v695, 2.0
    %v704 = vmul.f32 %v696, 2.0
    %v705 = vmul.f32 %v697, 2.0
    %v706 = vmul.f32 %v698, 2.0
    %v707 = vmul.f32 %v699, 2.0
    %v708 = vmul.f32 %v700, 2.0
    %v709 = vmul.f32 %v347, %v331
    %v710 = vmul.f32 %v348, %v332
    %v711 = vmul.f32 %v349, %v333
    %v712 = vmul.f32 %v350, %v334
    %v713 = vmul.f32 %v351, %v335
    %v714 = vmul.f32 %v352, %v336
    %v715 = vmul.f32 %v353, %v337
    %v716 = vmul.f32 %v354, %v338
    %v717 = vmul.f32 %v709, 2.0
    %v718 = vmul.f32 %v710, 2.0
    %v719 = vmul.f32 %v711, 2.0
    %v720 = vmul.f32 %v712, 2.0
    %v721 = vmul.f32 %v713, 2.0
    %v722 = vmul.f32 %v714, 2.0
    %v723 = vmul.f32 %v715, 2.0
    %v724 = vmul.f32 %v716, 2.0
    %v725 = vadd.f32 %v701, %v717
    %v726 = vadd.f32 %v702, %v718
    %v727 = vadd.f32 %v703, %v719
    %v728 = vadd.f32 %v704, %v720
    %v729 = vadd.f32 %v705, %v721
    %v730 = vadd.f32 %v706, %v722
    %v731 = vadd.f32 %v707, %v723
    %v732 = vadd.f32 %v708, %v724
    %s733 = scalar_lea.vmem %s1, 128
    %v734 = vld [vmem:[%s733] sm:$0xff]
    %v735 = vld [vmem:[%s733 + $0x8] sm:$0xff]
    %v736 = vld [vmem:[%s733 + $0x10] sm:$0xff]
    %v737 = vld [vmem:[%s733 + $0x18] sm:$0xff]
    %v738 = vld [vmem:[%s733 + $0x20] sm:$0xff]
    %v739 = vld [vmem:[%s733 + $0x28] sm:$0xff]
    %v740 = vld [vmem:[%s733 + $0x30] sm:$0xff]
    %v741 = vld [vmem:[%s733 + $0x38] sm:$0xf]
    %v742 = vsub.f32 %v734, %v725
    %v743 = vsub.f32 %v735, %v726
    %v744 = vsub.f32 %v736, %v727
    %v745 = vsub.f32 %v737, %v728
    %v746 = vsub.f32 %v738, %v729
    %v747 = vsub.f32 %v739, %v730
    %v748 = vsub.f32 %v740, %v731
    %v749 = vsub.f32 %v741, %v732
    %v750 = vmul.f32 %v742, %v742
    %v751 = vmul.f32 %v743, %v743
    %v752 = vmul.f32 %v744, %v744
    %v753 = vmul.f32 %v745, %v745
    %v754 = vmul.f32 %v746, %v746
    %v755 = vmul.f32 %v747, %v747
    %v756 = vmul.f32 %v748, %v748
    %v757 = vmul.f32 %v749, %v749
    %v758 = vadd.f32 %v592, %v750
    %v759 = vadd.f32 %v593, %v751
    %v760 = vadd.f32 %v594, %v752
    %v761 = vadd.f32 %v595, %v753
    %v762 = vadd.f32 %v596, %v754
    %v763 = vadd.f32 %v597, %v755
    %v764 = vadd.f32 %v598, %v756
    %v765 = vadd.f32 %v599, %v757
    %v766 = vmul.f32 %v212, %v725
    %v767 = vmul.f32 %v213, %v726
    %v768 = vmul.f32 %v214, %v727
    %v769 = vmul.f32 %v215, %v728
    %v770 = vmul.f32 %v216, %v729
    %v771 = vmul.f32 %v217, %v730
    %v772 = vmul.f32 %v218, %v731
    %v773 = vmul.f32 %v219, %v732
    %v774 = vadd.f32 %v766, %v767
    %v775 = vadd.f32 %v774, %v768
    %v776 = vadd.f32 %v775, %v769
    %v777 = vadd.f32 %v776, %v770
    %v778 = vadd.f32 %v777, %v771
    %v779 = vadd.f32 %v778, %v772
    %v780 = vsel %vm59, %v773, 0.0
    %v781 = vadd.f32 %v779, %v780
    %v782 = vrot.slane %v781, 4
    %v783 = vadd.f32 %v781, %v782
    %v784 = vrot.slane %v783, 2
    %v785 = vadd.f32 %v783, %v784
    %v786 = vrot.slane %v785, 1
    %v787 = vadd.f32 %v785, %v786
    %s788 = scalar_lea.vmem %s4, 128
    %v789 = vld [vmem:[%s788] sm:$0xff]
    %v790 = vld [vmem:[%s788 + $0x8] sm:$0xff]
    %v791 = vld [vmem:[%s788 + $0x10] sm:$0xff]
    %v792 = vld [vmem:[%s788 + $0x18] sm:$0xff]
    %v793 = vld [vmem:[%s788 + $0x20] sm:$0xff]
    %v794 = vld [vmem:[%s788 + $0x28] sm:$0xff]
    %v795 = vld [vmem:[%s788 + $0x30] sm:$0xff]
    %v796 = vld [vmem:[%s788 + $0x38] sm:$0xf]
    %798 = vset.pattern.permute.xlu0 0
    %799 = vperm.xlu0 %798, %v789
    %v800 = vpop.permute.xlu0 %799
    %803 = vset.pattern.permute.xlu0 0
    %804 = vperm.xlu0 %803, %v790
    %v805 = vpop.permute.xlu0 %804
    %808 = vset.pattern.permute.xlu0 0
    %809 = vperm.xlu0 %808, %v791
    %v810 = vpop.permute.xlu0 %809
    %813 = vset.pattern.permute.xlu0 0
    %814 = vperm.xlu0 %813, %v792
    %v815 = vpop.permute.xlu0 %814
    %818 = vset.pattern.permute.xlu0 0
    %819 = vperm.xlu0 %818, %v793
    %v820 = vpop.permute.xlu0 %819
    %823 = vset.pattern.permute.xlu0 0
    %824 = vperm.xlu0 %823, %v794
    %v825 = vpop.permute.xlu0 %824
    %828 = vset.pattern.permute.xlu0 0
    %829 = vperm.xlu0 %828, %v795
    %v830 = vpop.permute.xlu0 %829
    %833 = vset.pattern.permute.xlu0 0
    %834 = vperm.xlu0 %833, %v796
    %v835 = vpop.permute.xlu0 %834
    %v837 = vmul.f32 %v212, %v800
    %v838 = vmul.f32 %v213, %v805
    %v839 = vmul.f32 %v214, %v810
    %v840 = vmul.f32 %v215, %v815
    %v841 = vmul.f32 %v216, %v820
    %v842 = vmul.f32 %v217, %v825
    %v843 = vmul.f32 %v218, %v830
    %v844 = vmul.f32 %v219, %v835
    %v845 = vadd.f32 %v837, %v838
    %v846 = vadd.f32 %v845, %v839
    %v847 = vadd.f32 %v846, %v840
    %v848 = vadd.f32 %v847, %v841
    %v849 = vadd.f32 %v848, %v842
    %v850 = vadd.f32 %v849, %v843
    %v851 = vsel %vm59, %v844, 0.0
    %v852 = vadd.f32 %v850, %v851
    %v853 = vrot.slane %v852, 4
    %v854 = vadd.f32 %v852, %v853
    %v855 = vrot.slane %v854, 2
    %v856 = vadd.f32 %v854, %v855
    %v857 = vrot.slane %v856, 1
    %v858 = vadd.f32 %v856, %v857
    %v859 = vadd.f32 %v535, %v551
    %v860 = vadd.f32 %v536, %v552
    %v861 = vadd.f32 %v537, %v553
    %v862 = vadd.f32 %v538, %v554
    %v863 = vadd.f32 %v539, %v555
    %v864 = vadd.f32 %v540, %v556
    %v865 = vadd.f32 %v541, %v557
    %v866 = vadd.f32 %v542, %v558
    %s867 = scalar_lea.vmem %s1, 192
    %v868 = vld [vmem:[%s867] sm:$0xff]
    %v869 = vld [vmem:[%s867 + $0x8] sm:$0xff]
    %v870 = vld [vmem:[%s867 + $0x10] sm:$0xff]
    %v871 = vld [vmem:[%s867 + $0x18] sm:$0xff]
    %v872 = vld [vmem:[%s867 + $0x20] sm:$0xff]
    %v873 = vld [vmem:[%s867 + $0x28] sm:$0xff]
    %v874 = vld [vmem:[%s867 + $0x30] sm:$0xff]
    %v875 = vld [vmem:[%s867 + $0x38] sm:$0xf]
    %v876 = vsub.f32 %v868, %v859
    %v877 = vsub.f32 %v869, %v860
    %v878 = vsub.f32 %v870, %v861
    %v879 = vsub.f32 %v871, %v862
    %v880 = vsub.f32 %v872, %v863
    %v881 = vsub.f32 %v873, %v864
    %v882 = vsub.f32 %v874, %v865
    %v883 = vsub.f32 %v875, %v866
    %v884 = vmul.f32 %v876, %v876
    %v885 = vmul.f32 %v877, %v877
    %v886 = vmul.f32 %v878, %v878
    %v887 = vmul.f32 %v879, %v879
    %v888 = vmul.f32 %v880, %v880
    %v889 = vmul.f32 %v881, %v881
    %v890 = vmul.f32 %v882, %v882
    %v891 = vmul.f32 %v883, %v883
    %v892 = vadd.f32 %v758, %v884
    %v893 = vadd.f32 %v759, %v885
    %v894 = vadd.f32 %v760, %v886
    %v895 = vadd.f32 %v761, %v887
    %v896 = vadd.f32 %v762, %v888
    %v897 = vadd.f32 %v763, %v889
    %v898 = vadd.f32 %v764, %v890
    %v899 = vadd.f32 %v765, %v891
    %v900 = vmul.f32 %v212, %v859
    %v901 = vmul.f32 %v213, %v860
    %v902 = vmul.f32 %v214, %v861
    %v903 = vmul.f32 %v215, %v862
    %v904 = vmul.f32 %v216, %v863
    %v905 = vmul.f32 %v217, %v864
    %v906 = vmul.f32 %v218, %v865
    %v907 = vmul.f32 %v219, %v866
    %v908 = vadd.f32 %v900, %v901
    %v909 = vadd.f32 %v908, %v902
    %v910 = vadd.f32 %v909, %v903
    %v911 = vadd.f32 %v910, %v904
    %v912 = vadd.f32 %v911, %v905
    %v913 = vadd.f32 %v912, %v906
    %v914 = vsel %vm59, %v907, 0.0
    %v915 = vadd.f32 %v913, %v914
    %v916 = vrot.slane %v915, 4
    %v917 = vadd.f32 %v915, %v916
    %v918 = vrot.slane %v917, 2
    %v919 = vadd.f32 %v917, %v918
    %v920 = vrot.slane %v919, 1
    %v921 = vadd.f32 %v919, %v920
    %s922 = scalar_lea.vmem %s4, 192
    %v923 = vld [vmem:[%s922] sm:$0xff]
    %v924 = vld [vmem:[%s922 + $0x8] sm:$0xff]
    %v925 = vld [vmem:[%s922 + $0x10] sm:$0xff]
    %v926 = vld [vmem:[%s922 + $0x18] sm:$0xff]
    %v927 = vld [vmem:[%s922 + $0x20] sm:$0xff]
    %v928 = vld [vmem:[%s922 + $0x28] sm:$0xff]
    %v929 = vld [vmem:[%s922 + $0x30] sm:$0xff]
    %v930 = vld [vmem:[%s922 + $0x38] sm:$0xf]
    %932 = vset.pattern.permute.xlu0 0
    %933 = vperm.xlu0 %932, %v923
    %v934 = vpop.permute.xlu0 %933
    %937 = vset.pattern.permute.xlu0 0
    %938 = vperm.xlu0 %937, %v924
    %v939 = vpop.permute.xlu0 %938
    %942 = vset.pattern.permute.xlu0 0
    %943 = vperm.xlu0 %942, %v925
    %v944 = vpop.permute.xlu0 %943
    %947 = vset.pattern.permute.xlu0 0
    %948 = vperm.xlu0 %947, %v926
    %v949 = vpop.permute.xlu0 %948
    %952 = vset.pattern.permute.xlu0 0
    %953 = vperm.xlu0 %952, %v927
    %v954 = vpop.permute.xlu0 %953
    %957 = vset.pattern.permute.xlu0 0
    %958 = vperm.xlu0 %957, %v928
    %v959 = vpop.permute.xlu0 %958
    %962 = vset.pattern.permute.xlu0 0
    %963 = vperm.xlu0 %962, %v929
    %v964 = vpop.permute.xlu0 %963
    %967 = vset.pattern.permute.xlu0 0
    %968 = vperm.xlu0 %967, %v930
    %v969 = vpop.permute.xlu0 %968
    %v971 = vmul.f32 %v212, %v934
    %v972 = vmul.f32 %v213, %v939
    %v973 = vmul.f32 %v214, %v944
    %v974 = vmul.f32 %v215, %v949
    %v975 = vmul.f32 %v216, %v954
    %v976 = vmul.f32 %v217, %v959
    %v977 = vmul.f32 %v218, %v964
    %v978 = vmul.f32 %v219, %v969
    %v979 = vadd.f32 %v971, %v972
    %v980 = vadd.f32 %v979, %v973
    %v981 = vadd.f32 %v980, %v974
    %v982 = vadd.f32 %v981, %v975
    %v983 = vadd.f32 %v982, %v976
    %v984 = vadd.f32 %v983, %v977
    %v985 = vsel %vm59, %v978, 0.0
    %v986 = vadd.f32 %v984, %v985
    %v987 = vrot.slane %v986, 4
    %v988 = vadd.f32 %v986, %v987
    %v989 = vrot.slane %v988, 2
    %v990 = vadd.f32 %v988, %v989
    %v991 = vrot.slane %v990, 1
    %v992 = vadd.f32 %v990, %v991
    %v993 = vmul.f32 %v339, %v339
    %v994 = vmul.f32 %v340, %v340
    %v995 = vmul.f32 %v341, %v341
    %v996 = vmul.f32 %v342, %v342
    %v997 = vmul.f32 %v343, %v343
    %v998 = vmul.f32 %v344, %v344
    %v999 = vmul.f32 %v345, %v345
    %v1000 = vmul.f32 %v346, %v346
    %v1001 = vmul.f32 %v993, 2.0
    %v1002 = vmul.f32 %v994, 2.0
    %v1003 = vmul.f32 %v995, 2.0
    %v1004 = vmul.f32 %v996, 2.0
    %v1005 = vmul.f32 %v997, 2.0
    %v1006 = vmul.f32 %v998, 2.0
    %v1007 = vmul.f32 %v999, 2.0
    %v1008 = vmul.f32 %v1000, 2.0
    %v1009 = vsub.f32 1.0, %v1001
    %v1010 = vsub.f32 1.0, %v1002
    %v1011 = vsub.f32 1.0, %v1003
    %v1012 = vsub.f32 1.0, %v1004
    %v1013 = vsub.f32 1.0, %v1005
    %v1014 = vsub.f32 1.0, %v1006
    %v1015 = vsub.f32 1.0, %v1007
    %v1016 = vsub.f32 1.0, %v1008
    %v1017 = vsub.f32 %v1009, %v395
    %v1018 = vsub.f32 %v1010, %v396
    %v1019 = vsub.f32 %v1011, %v397
    %v1020 = vsub.f32 %v1012, %v398
    %v1021 = vsub.f32 %v1013, %v399
    %v1022 = vsub.f32 %v1014, %v400
    %v1023 = vsub.f32 %v1015, %v401
    %v1024 = vsub.f32 %v1016, %v402
    %s1025 = scalar_lea.vmem %s1, 256
    %v1026 = vld [vmem:[%s1025] sm:$0xff]
    %v1027 = vld [vmem:[%s1025 + $0x8] sm:$0xff]
    %v1028 = vld [vmem:[%s1025 + $0x10] sm:$0xff]
    %v1029 = vld [vmem:[%s1025 + $0x18] sm:$0xff]
    %v1030 = vld [vmem:[%s1025 + $0x20] sm:$0xff]
    %v1031 = vld [vmem:[%s1025 + $0x28] sm:$0xff]
    %v1032 = vld [vmem:[%s1025 + $0x30] sm:$0xff]
    %v1033 = vld [vmem:[%s1025 + $0x38] sm:$0xf]
    %v1034 = vsub.f32 %v1026, %v1017
    %v1035 = vsub.f32 %v1027, %v1018
    %v1036 = vsub.f32 %v1028, %v1019
    %v1037 = vsub.f32 %v1029, %v1020
    %v1038 = vsub.f32 %v1030, %v1021
    %v1039 = vsub.f32 %v1031, %v1022
    %v1040 = vsub.f32 %v1032, %v1023
    %v1041 = vsub.f32 %v1033, %v1024
    %v1042 = vmul.f32 %v1034, %v1034
    %v1043 = vmul.f32 %v1035, %v1035
    %v1044 = vmul.f32 %v1036, %v1036
    %v1045 = vmul.f32 %v1037, %v1037
    %v1046 = vmul.f32 %v1038, %v1038
    %v1047 = vmul.f32 %v1039, %v1039
    %v1048 = vmul.f32 %v1040, %v1040
    %v1049 = vmul.f32 %v1041, %v1041
    %v1050 = vadd.f32 %v892, %v1042
    %v1051 = vadd.f32 %v893, %v1043
    %v1052 = vadd.f32 %v894, %v1044
    %v1053 = vadd.f32 %v895, %v1045
    %v1054 = vadd.f32 %v896, %v1046
    %v1055 = vadd.f32 %v897, %v1047
    %v1056 = vadd.f32 %v898, %v1048
    %v1057 = vadd.f32 %v899, %v1049
    %v1058 = vadd.f32 %v411, %v1026
    %v1059 = vadd.f32 %v412, %v1027
    %v1060 = vadd.f32 %v413, %v1028
    %v1061 = vadd.f32 %v414, %v1029
    %v1062 = vadd.f32 %v415, %v1030
    %v1063 = vadd.f32 %v416, %v1031
    %v1064 = vadd.f32 %v417, %v1032
    %v1065 = vadd.f32 %v418, %v1033
    %v1066 = vmul.f32 %v212, %v1017
    %v1067 = vmul.f32 %v213, %v1018
    %v1068 = vmul.f32 %v214, %v1019
    %v1069 = vmul.f32 %v215, %v1020
    %v1070 = vmul.f32 %v216, %v1021
    %v1071 = vmul.f32 %v217, %v1022
    %v1072 = vmul.f32 %v218, %v1023
    %v1073 = vmul.f32 %v219, %v1024
    %v1074 = vadd.f32 %v1066, %v1067
    %v1075 = vadd.f32 %v1074, %v1068
    %v1076 = vadd.f32 %v1075, %v1069
    %v1077 = vadd.f32 %v1076, %v1070
    %v1078 = vadd.f32 %v1077, %v1071
    %v1079 = vadd.f32 %v1078, %v1072
    %v1080 = vsel %vm59, %v1073, 0.0
    %v1081 = vadd.f32 %v1079, %v1080
    %v1082 = vrot.slane %v1081, 4
    %v1083 = vadd.f32 %v1081, %v1082
    %v1084 = vrot.slane %v1083, 2
    %v1085 = vadd.f32 %v1083, %v1084
    %v1086 = vrot.slane %v1085, 1
    %v1087 = vadd.f32 %v1085, %v1086
    %s1088 = scalar_lea.vmem %s4, 256
    %v1089 = vld [vmem:[%s1088] sm:$0xff]
    %v1090 = vld [vmem:[%s1088 + $0x8] sm:$0xff]
    %v1091 = vld [vmem:[%s1088 + $0x10] sm:$0xff]
    %v1092 = vld [vmem:[%s1088 + $0x18] sm:$0xff]
    %v1093 = vld [vmem:[%s1088 + $0x20] sm:$0xff]
    %v1094 = vld [vmem:[%s1088 + $0x28] sm:$0xff]
    %v1095 = vld [vmem:[%s1088 + $0x30] sm:$0xff]
    %v1096 = vld [vmem:[%s1088 + $0x38] sm:$0xf]
    %1098 = vset.pattern.permute.xlu0 0
    %1099 = vperm.xlu0 %1098, %v1089
    %v1100 = vpop.permute.xlu0 %1099
    %1103 = vset.pattern.permute.xlu0 0
    %1104 = vperm.xlu0 %1103, %v1090
    %v1105 = vpop.permute.xlu0 %1104
    %1108 = vset.pattern.permute.xlu0 0
    %1109 = vperm.xlu0 %1108, %v1091
    %v1110 = vpop.permute.xlu0 %1109
    %1113 = vset.pattern.permute.xlu0 0
    %1114 = vperm.xlu0 %1113, %v1092
    %v1115 = vpop.permute.xlu0 %1114
    %1118 = vset.pattern.permute.xlu0 0
    %1119 = vperm.xlu0 %1118, %v1093
    %v1120 = vpop.permute.xlu0 %1119
    %1123 = vset.pattern.permute.xlu0 0
    %1124 = vperm.xlu0 %1123, %v1094
    %v1125 = vpop.permute.xlu0 %1124
    %1128 = vset.pattern.permute.xlu0 0
    %1129 = vperm.xlu0 %1128, %v1095
    %v1130 = vpop.permute.xlu0 %1129
    %1133 = vset.pattern.permute.xlu0 0
    %1134 = vperm.xlu0 %1133, %v1096
    %v1135 = vpop.permute.xlu0 %1134
    %v1137 = vmul.f32 %v212, %v1100
    %v1138 = vmul.f32 %v213, %v1105
    %v1139 = vmul.f32 %v214, %v1110
    %v1140 = vmul.f32 %v215, %v1115
    %v1141 = vmul.f32 %v216, %v1120
    %v1142 = vmul.f32 %v217, %v1125
    %v1143 = vmul.f32 %v218, %v1130
    %v1144 = vmul.f32 %v219, %v1135
    %v1145 = vadd.f32 %v1137, %v1138
    %v1146 = vadd.f32 %v1145, %v1139
    %v1147 = vadd.f32 %v1146, %v1140
    %v1148 = vadd.f32 %v1147, %v1141
    %v1149 = vadd.f32 %v1148, %v1142
    %v1150 = vadd.f32 %v1149, %v1143
    %v1151 = vsel %vm59, %v1144, 0.0
    %v1152 = vadd.f32 %v1150, %v1151
    %v1153 = vrot.slane %v1152, 4
    %v1154 = vadd.f32 %v1152, %v1153
    %v1155 = vrot.slane %v1154, 2
    %v1156 = vadd.f32 %v1154, %v1155
    %v1157 = vrot.slane %v1156, 1
    %v1158 = vadd.f32 %v1156, %v1157
    %v1159 = vmul.f32 %v347, %v355
    %v1160 = vmul.f32 %v348, %v356
    %v1161 = vmul.f32 %v349, %v357
    %v1162 = vmul.f32 %v350, %v358
    %v1163 = vmul.f32 %v351, %v359
    %v1164 = vmul.f32 %v352, %v360
    %v1165 = vmul.f32 %v353, %v361
    %v1166 = vmul.f32 %v354, %v362
    %v1167 = vmul.f32 %v1159, 2.0
    %v1168 = vmul.f32 %v1160, 2.0
    %v1169 = vmul.f32 %v1161, 2.0
    %v1170 = vmul.f32 %v1162, 2.0
    %v1171 = vmul.f32 %v1163, 2.0
    %v1172 = vmul.f32 %v1164, 2.0
    %v1173 = vmul.f32 %v1165, 2.0
    %v1174 = vmul.f32 %v1166, 2.0
    %v1175 = vmul.f32 %v339, %v331
    %v1176 = vmul.f32 %v340, %v332
    %v1177 = vmul.f32 %v341, %v333
    %v1178 = vmul.f32 %v342, %v334
    %v1179 = vmul.f32 %v343, %v335
    %v1180 = vmul.f32 %v344, %v336
    %v1181 = vmul.f32 %v345, %v337
    %v1182 = vmul.f32 %v346, %v338
    %v1183 = vmul.f32 %v1175, 2.0
    %v1184 = vmul.f32 %v1176, 2.0
    %v1185 = vmul.f32 %v1177, 2.0
    %v1186 = vmul.f32 %v1178, 2.0
    %v1187 = vmul.f32 %v1179, 2.0
    %v1188 = vmul.f32 %v1180, 2.0
    %v1189 = vmul.f32 %v1181, 2.0
    %v1190 = vmul.f32 %v1182, 2.0
    %v1191 = vsub.f32 %v1167, %v1183
    %v1192 = vsub.f32 %v1168, %v1184
    %v1193 = vsub.f32 %v1169, %v1185
    %v1194 = vsub.f32 %v1170, %v1186
    %v1195 = vsub.f32 %v1171, %v1187
    %v1196 = vsub.f32 %v1172, %v1188
    %v1197 = vsub.f32 %v1173, %v1189
    %v1198 = vsub.f32 %v1174, %v1190
    %s1199 = scalar_lea.vmem %s1, 320
    %v1200 = vld [vmem:[%s1199] sm:$0xff]
    %v1201 = vld [vmem:[%s1199 + $0x8] sm:$0xff]
    %v1202 = vld [vmem:[%s1199 + $0x10] sm:$0xff]
    %v1203 = vld [vmem:[%s1199 + $0x18] sm:$0xff]
    %v1204 = vld [vmem:[%s1199 + $0x20] sm:$0xff]
    %v1205 = vld [vmem:[%s1199 + $0x28] sm:$0xff]
    %v1206 = vld [vmem:[%s1199 + $0x30] sm:$0xff]
    %v1207 = vld [vmem:[%s1199 + $0x38] sm:$0xf]
    %v1208 = vsub.f32 %v1200, %v1191
    %v1209 = vsub.f32 %v1201, %v1192
    %v1210 = vsub.f32 %v1202, %v1193
    %v1211 = vsub.f32 %v1203, %v1194
    %v1212 = vsub.f32 %v1204, %v1195
    %v1213 = vsub.f32 %v1205, %v1196
    %v1214 = vsub.f32 %v1206, %v1197
    %v1215 = vsub.f32 %v1207, %v1198
    %v1216 = vmul.f32 %v1208, %v1208
    %v1217 = vmul.f32 %v1209, %v1209
    %v1218 = vmul.f32 %v1210, %v1210
    %v1219 = vmul.f32 %v1211, %v1211
    %v1220 = vmul.f32 %v1212, %v1212
    %v1221 = vmul.f32 %v1213, %v1213
    %v1222 = vmul.f32 %v1214, %v1214
    %v1223 = vmul.f32 %v1215, %v1215
    %v1224 = vadd.f32 %v1050, %v1216
    %v1225 = vadd.f32 %v1051, %v1217
    %v1226 = vadd.f32 %v1052, %v1218
    %v1227 = vadd.f32 %v1053, %v1219
    %v1228 = vadd.f32 %v1054, %v1220
    %v1229 = vadd.f32 %v1055, %v1221
    %v1230 = vadd.f32 %v1056, %v1222
    %v1231 = vadd.f32 %v1057, %v1223
    %v1232 = vmul.f32 %v212, %v1191
    %v1233 = vmul.f32 %v213, %v1192
    %v1234 = vmul.f32 %v214, %v1193
    %v1235 = vmul.f32 %v215, %v1194
    %v1236 = vmul.f32 %v216, %v1195
    %v1237 = vmul.f32 %v217, %v1196
    %v1238 = vmul.f32 %v218, %v1197
    %v1239 = vmul.f32 %v219, %v1198
    %v1240 = vadd.f32 %v1232, %v1233
    %v1241 = vadd.f32 %v1240, %v1234
    %v1242 = vadd.f32 %v1241, %v1235
    %v1243 = vadd.f32 %v1242, %v1236
    %v1244 = vadd.f32 %v1243, %v1237
    %v1245 = vadd.f32 %v1244, %v1238
    %v1246 = vsel %vm59, %v1239, 0.0
    %v1247 = vadd.f32 %v1245, %v1246
    %v1248 = vrot.slane %v1247, 4
    %v1249 = vadd.f32 %v1247, %v1248
    %v1250 = vrot.slane %v1249, 2
    %v1251 = vadd.f32 %v1249, %v1250
    %v1252 = vrot.slane %v1251, 1
    %v1253 = vadd.f32 %v1251, %v1252
    %s1254 = scalar_lea.vmem %s4, 320
    %v1255 = vld [vmem:[%s1254] sm:$0xff]
    %v1256 = vld [vmem:[%s1254 + $0x8] sm:$0xff]
    %v1257 = vld [vmem:[%s1254 + $0x10] sm:$0xff]
    %v1258 = vld [vmem:[%s1254 + $0x18] sm:$0xff]
    %v1259 = vld [vmem:[%s1254 + $0x20] sm:$0xff]
    %v1260 = vld [vmem:[%s1254 + $0x28] sm:$0xff]
    %v1261 = vld [vmem:[%s1254 + $0x30] sm:$0xff]
    %v1262 = vld [vmem:[%s1254 + $0x38] sm:$0xf]
    %1264 = vset.pattern.permute.xlu0 0
    %1265 = vperm.xlu0 %1264, %v1255
    %v1266 = vpop.permute.xlu0 %1265
    %1269 = vset.pattern.permute.xlu0 0
    %1270 = vperm.xlu0 %1269, %v1256
    %v1271 = vpop.permute.xlu0 %1270
    %1274 = vset.pattern.permute.xlu0 0
    %1275 = vperm.xlu0 %1274, %v1257
    %v1276 = vpop.permute.xlu0 %1275
    %1279 = vset.pattern.permute.xlu0 0
    %1280 = vperm.xlu0 %1279, %v1258
    %v1281 = vpop.permute.xlu0 %1280
    %1284 = vset.pattern.permute.xlu0 0
    %1285 = vperm.xlu0 %1284, %v1259
    %v1286 = vpop.permute.xlu0 %1285
    %1289 = vset.pattern.permute.xlu0 0
    %1290 = vperm.xlu0 %1289, %v1260
    %v1291 = vpop.permute.xlu0 %1290
    %1294 = vset.pattern.permute.xlu0 0
    %1295 = vperm.xlu0 %1294, %v1261
    %v1296 = vpop.permute.xlu0 %1295
    %1299 = vset.pattern.permute.xlu0 0
    %1300 = vperm.xlu0 %1299, %v1262
    %v1301 = vpop.permute.xlu0 %1300
    %v1303 = vmul.f32 %v212, %v1266
    %v1304 = vmul.f32 %v213, %v1271
    %v1305 = vmul.f32 %v214, %v1276
    %v1306 = vmul.f32 %v215, %v1281
    %v1307 = vmul.f32 %v216, %v1286
    %v1308 = vmul.f32 %v217, %v1291
    %v1309 = vmul.f32 %v218, %v1296
    %v1310 = vmul.f32 %v219, %v1301
    %v1311 = vadd.f32 %v1303, %v1304
    %v1312 = vadd.f32 %v1311, %v1305
    %v1313 = vadd.f32 %v1312, %v1306
    %v1314 = vadd.f32 %v1313, %v1307
    %v1315 = vadd.f32 %v1314, %v1308
    %v1316 = vadd.f32 %v1315, %v1309
    %v1317 = vsel %vm59, %v1310, 0.0
    %v1318 = vadd.f32 %v1316, %v1317
    %v1319 = vrot.slane %v1318, 4
    %v1320 = vadd.f32 %v1318, %v1319
    %v1321 = vrot.slane %v1320, 2
    %v1322 = vadd.f32 %v1320, %v1321
    %v1323 = vrot.slane %v1322, 1
    %v1324 = vadd.f32 %v1322, %v1323
    %v1325 = vsub.f32 %v701, %v717
    %v1326 = vsub.f32 %v702, %v718
    %v1327 = vsub.f32 %v703, %v719
    %v1328 = vsub.f32 %v704, %v720
    %v1329 = vsub.f32 %v705, %v721
    %v1330 = vsub.f32 %v706, %v722
    %v1331 = vsub.f32 %v707, %v723
    %v1332 = vsub.f32 %v708, %v724
    %s1333 = scalar_lea.vmem %s1, 384
    %v1334 = vld [vmem:[%s1333] sm:$0xff]
    %v1335 = vld [vmem:[%s1333 + $0x8] sm:$0xff]
    %v1336 = vld [vmem:[%s1333 + $0x10] sm:$0xff]
    %v1337 = vld [vmem:[%s1333 + $0x18] sm:$0xff]
    %v1338 = vld [vmem:[%s1333 + $0x20] sm:$0xff]
    %v1339 = vld [vmem:[%s1333 + $0x28] sm:$0xff]
    %v1340 = vld [vmem:[%s1333 + $0x30] sm:$0xff]
    %v1341 = vld [vmem:[%s1333 + $0x38] sm:$0xf]
    %v1342 = vsub.f32 %v1334, %v1325
    %v1343 = vsub.f32 %v1335, %v1326
    %v1344 = vsub.f32 %v1336, %v1327
    %v1345 = vsub.f32 %v1337, %v1328
    %v1346 = vsub.f32 %v1338, %v1329
    %v1347 = vsub.f32 %v1339, %v1330
    %v1348 = vsub.f32 %v1340, %v1331
    %v1349 = vsub.f32 %v1341, %v1332
    %v1350 = vmul.f32 %v1342, %v1342
    %v1351 = vmul.f32 %v1343, %v1343
    %v1352 = vmul.f32 %v1344, %v1344
    %v1353 = vmul.f32 %v1345, %v1345
    %v1354 = vmul.f32 %v1346, %v1346
    %v1355 = vmul.f32 %v1347, %v1347
    %v1356 = vmul.f32 %v1348, %v1348
    %v1357 = vmul.f32 %v1349, %v1349
    %v1358 = vadd.f32 %v1224, %v1350
    %v1359 = vadd.f32 %v1225, %v1351
    %v1360 = vadd.f32 %v1226, %v1352
    %v1361 = vadd.f32 %v1227, %v1353
    %v1362 = vadd.f32 %v1228, %v1354
    %v1363 = vadd.f32 %v1229, %v1355
    %v1364 = vadd.f32 %v1230, %v1356
    %v1365 = vadd.f32 %v1231, %v1357
    %v1366 = vmul.f32 %v212, %v1325
    %v1367 = vmul.f32 %v213, %v1326
    %v1368 = vmul.f32 %v214, %v1327
    %v1369 = vmul.f32 %v215, %v1328
    %v1370 = vmul.f32 %v216, %v1329
    %v1371 = vmul.f32 %v217, %v1330
    %v1372 = vmul.f32 %v218, %v1331
    %v1373 = vmul.f32 %v219, %v1332
    %v1374 = vadd.f32 %v1366, %v1367
    %v1375 = vadd.f32 %v1374, %v1368
    %v1376 = vadd.f32 %v1375, %v1369
    %v1377 = vadd.f32 %v1376, %v1370
    %v1378 = vadd.f32 %v1377, %v1371
    %v1379 = vadd.f32 %v1378, %v1372
    %v1380 = vsel %vm59, %v1373, 0.0
    %v1381 = vadd.f32 %v1379, %v1380
    %v1382 = vrot.slane %v1381, 4
    %v1383 = vadd.f32 %v1381, %v1382
    %v1384 = vrot.slane %v1383, 2
    %v1385 = vadd.f32 %v1383, %v1384
    %v1386 = vrot.slane %v1385, 1
    %v1387 = vadd.f32 %v1385, %v1386
    %s1388 = scalar_lea.vmem %s4, 384
    %v1389 = vld [vmem:[%s1388] sm:$0xff]
    %v1390 = vld [vmem:[%s1388 + $0x8] sm:$0xff]
    %v1391 = vld [vmem:[%s1388 + $0x10] sm:$0xff]
    %v1392 = vld [vmem:[%s1388 + $0x18] sm:$0xff]
    %v1393 = vld [vmem:[%s1388 + $0x20] sm:$0xff]
    %v1394 = vld [vmem:[%s1388 + $0x28] sm:$0xff]
    %v1395 = vld [vmem:[%s1388 + $0x30] sm:$0xff]
    %v1396 = vld [vmem:[%s1388 + $0x38] sm:$0xf]
    %1398 = vset.pattern.permute.xlu0 0
    %1399 = vperm.xlu0 %1398, %v1389
    %v1400 = vpop.permute.xlu0 %1399
    %1403 = vset.pattern.permute.xlu0 0
    %1404 = vperm.xlu0 %1403, %v1390
    %v1405 = vpop.permute.xlu0 %1404
    %1408 = vset.pattern.permute.xlu0 0
    %1409 = vperm.xlu0 %1408, %v1391
    %v1410 = vpop.permute.xlu0 %1409
    %1413 = vset.pattern.permute.xlu0 0
    %1414 = vperm.xlu0 %1413, %v1392
    %v1415 = vpop.permute.xlu0 %1414
    %1418 = vset.pattern.permute.xlu0 0
    %1419 = vperm.xlu0 %1418, %v1393
    %v1420 = vpop.permute.xlu0 %1419
    %1423 = vset.pattern.permute.xlu0 0
    %1424 = vperm.xlu0 %1423, %v1394
    %v1425 = vpop.permute.xlu0 %1424
    %1428 = vset.pattern.permute.xlu0 0
    %1429 = vperm.xlu0 %1428, %v1395
    %v1430 = vpop.permute.xlu0 %1429
    %1433 = vset.pattern.permute.xlu0 0
    %1434 = vperm.xlu0 %1433, %v1396
    %v1435 = vpop.permute.xlu0 %1434
    %v1437 = vmul.f32 %v212, %v1400
    %v1438 = vmul.f32 %v213, %v1405
    %v1439 = vmul.f32 %v214, %v1410
    %v1440 = vmul.f32 %v215, %v1415
    %v1441 = vmul.f32 %v216, %v1420
    %v1442 = vmul.f32 %v217, %v1425
    %v1443 = vmul.f32 %v218, %v1430
    %v1444 = vmul.f32 %v219, %v1435
    %v1445 = vadd.f32 %v1437, %v1438
    %v1446 = vadd.f32 %v1445, %v1439
    %v1447 = vadd.f32 %v1446, %v1440
    %v1448 = vadd.f32 %v1447, %v1441
    %v1449 = vadd.f32 %v1448, %v1442
    %v1450 = vadd.f32 %v1449, %v1443
    %v1451 = vsel %vm59, %v1444, 0.0
    %v1452 = vadd.f32 %v1450, %v1451
    %v1453 = vrot.slane %v1452, 4
    %v1454 = vadd.f32 %v1452, %v1453
    %v1455 = vrot.slane %v1454, 2
    %v1456 = vadd.f32 %v1454, %v1455
    %v1457 = vrot.slane %v1456, 1
    %v1458 = vadd.f32 %v1456, %v1457
    %v1459 = vadd.f32 %v1167, %v1183
    %v1460 = vadd.f32 %v1168, %v1184
    %v1461 = vadd.f32 %v1169, %v1185
    %v1462 = vadd.f32 %v1170, %v1186
    %v1463 = vadd.f32 %v1171, %v1187
    %v1464 = vadd.f32 %v1172, %v1188
    %v1465 = vadd.f32 %v1173, %v1189
    %v1466 = vadd.f32 %v1174, %v1190
    %s1467 = scalar_lea.vmem %s1, 448
    %v1468 = vld [vmem:[%s1467] sm:$0xff]
    %v1469 = vld [vmem:[%s1467 + $0x8] sm:$0xff]
    %v1470 = vld [vmem:[%s1467 + $0x10] sm:$0xff]
    %v1471 = vld [vmem:[%s1467 + $0x18] sm:$0xff]
    %v1472 = vld [vmem:[%s1467 + $0x20] sm:$0xff]
    %v1473 = vld [vmem:[%s1467 + $0x28] sm:$0xff]
    %v1474 = vld [vmem:[%s1467 + $0x30] sm:$0xff]
    %v1475 = vld [vmem:[%s1467 + $0x38] sm:$0xf]
    %v1476 = vsub.f32 %v1468, %v1459
    %v1477 = vsub.f32 %v1469, %v1460
    %v1478 = vsub.f32 %v1470, %v1461
    %v1479 = vsub.f32 %v1471, %v1462
    %v1480 = vsub.f32 %v1472, %v1463
    %v1481 = vsub.f32 %v1473, %v1464
    %v1482 = vsub.f32 %v1474, %v1465
    %v1483 = vsub.f32 %v1475, %v1466
    %v1484 = vmul.f32 %v1476, %v1476
    %v1485 = vmul.f32 %v1477, %v1477
    %v1486 = vmul.f32 %v1478, %v1478
    %v1487 = vmul.f32 %v1479, %v1479
    %v1488 = vmul.f32 %v1480, %v1480
    %v1489 = vmul.f32 %v1481, %v1481
    %v1490 = vmul.f32 %v1482, %v1482
    %v1491 = vmul.f32 %v1483, %v1483
    %v1492 = vadd.f32 %v1358, %v1484
    %v1493 = vadd.f32 %v1359, %v1485
    %v1494 = vadd.f32 %v1360, %v1486
    %v1495 = vadd.f32 %v1361, %v1487
    %v1496 = vadd.f32 %v1362, %v1488
    %v1497 = vadd.f32 %v1363, %v1489
    %v1498 = vadd.f32 %v1364, %v1490
    %v1499 = vadd.f32 %v1365, %v1491
    %v1500 = vmul.f32 %v212, %v1459
    %v1501 = vmul.f32 %v213, %v1460
    %v1502 = vmul.f32 %v214, %v1461
    %v1503 = vmul.f32 %v215, %v1462
    %v1504 = vmul.f32 %v216, %v1463
    %v1505 = vmul.f32 %v217, %v1464
    %v1506 = vmul.f32 %v218, %v1465
    %v1507 = vmul.f32 %v219, %v1466
    %v1508 = vadd.f32 %v1500, %v1501
    %v1509 = vadd.f32 %v1508, %v1502
    %v1510 = vadd.f32 %v1509, %v1503
    %v1511 = vadd.f32 %v1510, %v1504
    %v1512 = vadd.f32 %v1511, %v1505
    %v1513 = vadd.f32 %v1512, %v1506
    %v1514 = vsel %vm59, %v1507, 0.0
    %v1515 = vadd.f32 %v1513, %v1514
    %v1516 = vrot.slane %v1515, 4
    %v1517 = vadd.f32 %v1515, %v1516
    %v1518 = vrot.slane %v1517, 2
    %v1519 = vadd.f32 %v1517, %v1518
    %v1520 = vrot.slane %v1519, 1
    %v1521 = vadd.f32 %v1519, %v1520
    %s1522 = scalar_lea.vmem %s4, 448
    %v1523 = vld [vmem:[%s1522] sm:$0xff]
    %v1524 = vld [vmem:[%s1522 + $0x8] sm:$0xff]
    %v1525 = vld [vmem:[%s1522 + $0x10] sm:$0xff]
    %v1526 = vld [vmem:[%s1522 + $0x18] sm:$0xff]
    %v1527 = vld [vmem:[%s1522 + $0x20] sm:$0xff]
    %v1528 = vld [vmem:[%s1522 + $0x28] sm:$0xff]
    %v1529 = vld [vmem:[%s1522 + $0x30] sm:$0xff]
    %v1530 = vld [vmem:[%s1522 + $0x38] sm:$0xf]
    %1532 = vset.pattern.permute.xlu0 0
    %1533 = vperm.xlu0 %1532, %v1523
    %v1534 = vpop.permute.xlu0 %1533
    %1537 = vset.pattern.permute.xlu0 0
    %1538 = vperm.xlu0 %1537, %v1524
    %v1539 = vpop.permute.xlu0 %1538
    %1542 = vset.pattern.permute.xlu0 0
    %1543 = vperm.xlu0 %1542, %v1525
    %v1544 = vpop.permute.xlu0 %1543
    %1547 = vset.pattern.permute.xlu0 0
    %1548 = vperm.xlu0 %1547, %v1526
    %v1549 = vpop.permute.xlu0 %1548
    %1552 = vset.pattern.permute.xlu0 0
    %1553 = vperm.xlu0 %1552, %v1527
    %v1554 = vpop.permute.xlu0 %1553
    %1557 = vset.pattern.permute.xlu0 0
    %1558 = vperm.xlu0 %1557, %v1528
    %v1559 = vpop.permute.xlu0 %1558
    %1562 = vset.pattern.permute.xlu0 0
    %1563 = vperm.xlu0 %1562, %v1529
    %v1564 = vpop.permute.xlu0 %1563
    %1567 = vset.pattern.permute.xlu0 0
    %1568 = vperm.xlu0 %1567, %v1530
    %v1569 = vpop.permute.xlu0 %1568
    %v1571 = vmul.f32 %v212, %v1534
    %v1572 = vmul.f32 %v213, %v1539
    %v1573 = vmul.f32 %v214, %v1544
    %v1574 = vmul.f32 %v215, %v1549
    %v1575 = vmul.f32 %v216, %v1554
    %v1576 = vmul.f32 %v217, %v1559
    %v1577 = vmul.f32 %v218, %v1564
    %v1578 = vmul.f32 %v219, %v1569
    %v1579 = vadd.f32 %v1571, %v1572
    %v1580 = vadd.f32 %v1579, %v1573
    %v1581 = vadd.f32 %v1580, %v1574
    %v1582 = vadd.f32 %v1581, %v1575
    %v1583 = vadd.f32 %v1582, %v1576
    %v1584 = vadd.f32 %v1583, %v1577
    %v1585 = vsel %vm59, %v1578, 0.0
    %v1586 = vadd.f32 %v1584, %v1585
    %v1587 = vrot.slane %v1586, 4
    %v1588 = vadd.f32 %v1586, %v1587
    %v1589 = vrot.slane %v1588, 2
    %v1590 = vadd.f32 %v1588, %v1589
    %v1591 = vrot.slane %v1590, 1
    %v1592 = vadd.f32 %v1590, %v1591
    %v1593 = vsub.f32 %v1009, %v371
    %v1594 = vsub.f32 %v1010, %v372
    %v1595 = vsub.f32 %v1011, %v373
    %v1596 = vsub.f32 %v1012, %v374
    %v1597 = vsub.f32 %v1013, %v375
    %v1598 = vsub.f32 %v1014, %v376
    %v1599 = vsub.f32 %v1015, %v377
    %v1600 = vsub.f32 %v1016, %v378
    %s1601 = scalar_lea.vmem %s1, 512
    %v1602 = vld [vmem:[%s1601] sm:$0xff]
    %v1603 = vld [vmem:[%s1601 + $0x8] sm:$0xff]
    %v1604 = vld [vmem:[%s1601 + $0x10] sm:$0xff]
    %v1605 = vld [vmem:[%s1601 + $0x18] sm:$0xff]
    %v1606 = vld [vmem:[%s1601 + $0x20] sm:$0xff]
    %v1607 = vld [vmem:[%s1601 + $0x28] sm:$0xff]
    %v1608 = vld [vmem:[%s1601 + $0x30] sm:$0xff]
    %v1609 = vld [vmem:[%s1601 + $0x38] sm:$0xf]
    %v1610 = vsub.f32 %v1602, %v1593
    %v1611 = vsub.f32 %v1603, %v1594
    %v1612 = vsub.f32 %v1604, %v1595
    %v1613 = vsub.f32 %v1605, %v1596
    %v1614 = vsub.f32 %v1606, %v1597
    %v1615 = vsub.f32 %v1607, %v1598
    %v1616 = vsub.f32 %v1608, %v1599
    %v1617 = vsub.f32 %v1609, %v1600
    %v1618 = vmul.f32 %v1610, %v1610
    %v1619 = vmul.f32 %v1611, %v1611
    %v1620 = vmul.f32 %v1612, %v1612
    %v1621 = vmul.f32 %v1613, %v1613
    %v1622 = vmul.f32 %v1614, %v1614
    %v1623 = vmul.f32 %v1615, %v1615
    %v1624 = vmul.f32 %v1616, %v1616
    %v1625 = vmul.f32 %v1617, %v1617
    %v1626 = vadd.f32 %v1492, %v1618
    %v1627 = vadd.f32 %v1493, %v1619
    %v1628 = vadd.f32 %v1494, %v1620
    %v1629 = vadd.f32 %v1495, %v1621
    %v1630 = vadd.f32 %v1496, %v1622
    %v1631 = vadd.f32 %v1497, %v1623
    %v1632 = vadd.f32 %v1498, %v1624
    %v1633 = vadd.f32 %v1499, %v1625
    %v1634 = vadd.f32 %v1058, %v1602
    %v1635 = vadd.f32 %v1059, %v1603
    %v1636 = vadd.f32 %v1060, %v1604
    %v1637 = vadd.f32 %v1061, %v1605
    %v1638 = vadd.f32 %v1062, %v1606
    %v1639 = vadd.f32 %v1063, %v1607
    %v1640 = vadd.f32 %v1064, %v1608
    %v1641 = vadd.f32 %v1065, %v1609
    %v1642 = vmul.f32 %v212, %v1593
    %v1643 = vmul.f32 %v213, %v1594
    %v1644 = vmul.f32 %v214, %v1595
    %v1645 = vmul.f32 %v215, %v1596
    %v1646 = vmul.f32 %v216, %v1597
    %v1647 = vmul.f32 %v217, %v1598
    %v1648 = vmul.f32 %v218, %v1599
    %v1649 = vmul.f32 %v219, %v1600
    %v1650 = vadd.f32 %v1642, %v1643
    %v1651 = vadd.f32 %v1650, %v1644
    %v1652 = vadd.f32 %v1651, %v1645
    %v1653 = vadd.f32 %v1652, %v1646
    %v1654 = vadd.f32 %v1653, %v1647
    %v1655 = vadd.f32 %v1654, %v1648
    %v1656 = vsel %vm59, %v1649, 0.0
    %v1657 = vadd.f32 %v1655, %v1656
    %v1658 = vrot.slane %v1657, 4
    %v1659 = vadd.f32 %v1657, %v1658
    %v1660 = vrot.slane %v1659, 2
    %v1661 = vadd.f32 %v1659, %v1660
    %v1662 = vrot.slane %v1661, 1
    %v1663 = vadd.f32 %v1661, %v1662
    %s1664 = scalar_lea.vmem %s4, 512
    %v1665 = vld [vmem:[%s1664] sm:$0xff]
    %v1666 = vld [vmem:[%s1664 + $0x8] sm:$0xff]
    %v1667 = vld [vmem:[%s1664 + $0x10] sm:$0xff]
    %v1668 = vld [vmem:[%s1664 + $0x18] sm:$0xff]
    %v1669 = vld [vmem:[%s1664 + $0x20] sm:$0xff]
    %v1670 = vld [vmem:[%s1664 + $0x28] sm:$0xff]
    %v1671 = vld [vmem:[%s1664 + $0x30] sm:$0xff]
    %v1672 = vld [vmem:[%s1664 + $0x38] sm:$0xf]
    %1674 = vset.pattern.permute.xlu0 0
    %1675 = vperm.xlu0 %1674, %v1665
    %v1676 = vpop.permute.xlu0 %1675
    %1679 = vset.pattern.permute.xlu0 0
    %1680 = vperm.xlu0 %1679, %v1666
    %v1681 = vpop.permute.xlu0 %1680
    %1684 = vset.pattern.permute.xlu0 0
    %1685 = vperm.xlu0 %1684, %v1667
    %v1686 = vpop.permute.xlu0 %1685
    %1689 = vset.pattern.permute.xlu0 0
    %1690 = vperm.xlu0 %1689, %v1668
    %v1691 = vpop.permute.xlu0 %1690
    %1694 = vset.pattern.permute.xlu0 0
    %1695 = vperm.xlu0 %1694, %v1669
    %v1696 = vpop.permute.xlu0 %1695
    %1699 = vset.pattern.permute.xlu0 0
    %1700 = vperm.xlu0 %1699, %v1670
    %v1701 = vpop.permute.xlu0 %1700
    %1704 = vset.pattern.permute.xlu0 0
    %1705 = vperm.xlu0 %1704, %v1671
    %v1706 = vpop.permute.xlu0 %1705
    %1709 = vset.pattern.permute.xlu0 0
    %1710 = vperm.xlu0 %1709, %v1672
    %v1711 = vpop.permute.xlu0 %1710
    %v1713 = vmul.f32 %v212, %v1676
    %v1714 = vmul.f32 %v213, %v1681
    %v1715 = vmul.f32 %v214, %v1686
    %v1716 = vmul.f32 %v215, %v1691
    %v1717 = vmul.f32 %v216, %v1696
    %v1718 = vmul.f32 %v217, %v1701
    %v1719 = vmul.f32 %v218, %v1706
    %v1720 = vmul.f32 %v219, %v1711
    %v1721 = vadd.f32 %v1713, %v1714
    %v1722 = vadd.f32 %v1721, %v1715
    %v1723 = vadd.f32 %v1722, %v1716
    %v1724 = vadd.f32 %v1723, %v1717
    %v1725 = vadd.f32 %v1724, %v1718
    %v1726 = vadd.f32 %v1725, %v1719
    %v1727 = vsel %vm59, %v1720, 0.0
    %v1728 = vadd.f32 %v1726, %v1727
    %v1729 = vrot.slane %v1728, 4
    %v1730 = vadd.f32 %v1728, %v1729
    %v1731 = vrot.slane %v1730, 2
    %v1732 = vadd.f32 %v1730, %v1731
    %v1733 = vrot.slane %v1732, 1
    %v1734 = vadd.f32 %v1732, %v1733
    %v1735 = vsub.f32 %v1634, 1.0
    %v1736 = vsub.f32 %v1635, 1.0
    %v1737 = vsub.f32 %v1636, 1.0
    %v1738 = vsub.f32 %v1637, 1.0
    %v1739 = vsub.f32 %v1638, 1.0
    %v1740 = vsub.f32 %v1639, 1.0
    %v1741 = vsub.f32 %v1640, 1.0
    %v1742 = vsub.f32 %v1641, 1.0
    %v1743 = vmul.f32 %v1735, 0.5
    %v1744 = vmul.f32 %v1736, 0.5
    %v1745 = vmul.f32 %v1737, 0.5
    %v1746 = vmul.f32 %v1738, 0.5
    %v1747 = vmul.f32 %v1739, 0.5
    %v1748 = vmul.f32 %v1740, 0.5
    %v1749 = vmul.f32 %v1741, 0.5
    %v1750 = vmul.f32 %v1742, 0.5
    %vm1751 = vcmp.gt.f32.partialorder %v1743, 0.5403023
    %vm1752 = vcmp.gt.f32.partialorder %v1744, 0.5403023
    %vm1753 = vcmp.gt.f32.partialorder %v1745, 0.5403023
    %vm1754 = vcmp.gt.f32.partialorder %v1746, 0.5403023
    %vm1755 = vcmp.gt.f32.partialorder %v1747, 0.5403023
    %vm1756 = vcmp.gt.f32.partialorder %v1748, 0.5403023
    %vm1757 = vcmp.gt.f32.partialorder %v1749, 0.5403023
    %vm1758 = vcmp.gt.f32.partialorder %v1750, 0.5403023
    %v1759 = vsel %vm1751, 1, 0
    %v1760 = vsel %vm1752, 1, 0
    %v1761 = vsel %vm1753, 1, 0
    %v1762 = vsel %vm1754, 1, 0
    %v1763 = vsel %vm1755, 1, 0
    %v1764 = vsel %vm1756, 1, 0
    %v1765 = vsel %vm1757, 1, 0
    %v1766 = vsel %vm1758, 1, 0
    %v1767 = vcvt.s32.f32 %v1759
    %v1768 = vcvt.s32.f32 %v1760
    %v1769 = vcvt.s32.f32 %v1761
    %v1770 = vcvt.s32.f32 %v1762
    %v1771 = vcvt.s32.f32 %v1763
    %v1772 = vcvt.s32.f32 %v1764
    %v1773 = vcvt.s32.f32 %v1765
    %v1774 = vcvt.s32.f32 %v1766
    %v1775 = vmul.f32 %v1767, %v28
    %v1776 = vmul.f32 %v1768, %v28
    %v1777 = vmul.f32 %v1769, %v28
    %v1778 = vmul.f32 %v1770, %v28
    %v1779 = vmul.f32 %v1771, %v28
    %v1780 = vmul.f32 %v1772, %v28
    %v1781 = vmul.f32 %v1773, %v28
    %v1782 = vmul.f32 %v1774, %v28
    %v1783 = vmul.f32 %v1775, %v1626
    %v1784 = vmul.f32 %v1776, %v1627
    %v1785 = vmul.f32 %v1777, %v1628
    %v1786 = vmul.f32 %v1778, %v1629
    %v1787 = vmul.f32 %v1779, %v1630
    %v1788 = vmul.f32 %v1780, %v1631
    %v1789 = vmul.f32 %v1781, %v1632
    %v1790 = vmul.f32 %v1782, %v1633
    %v1791 = vadd.f32 %v1783, %v1784
    %v1792 = vadd.f32 %v1791, %v1785
    %v1793 = vadd.f32 %v1792, %v1786
    %v1794 = vadd.f32 %v1793, %v1787
    %v1795 = vadd.f32 %v1794, %v1788
    %v1796 = vadd.f32 %v1795, %v1789
    %v1797 = vsel %vm59, %v1790, 0.0
    %v1798 = vadd.f32 %v1796, %v1797
    %v1799 = vrot.slane %v1798, 4
    %v1800 = vadd.f32 %v1798, %v1799
    %v1801 = vrot.slane %v1800, 2
    %v1802 = vadd.f32 %v1800, %v1801
    %v1803 = vrot.slane %v1802, 1
    %v1804 = vadd.f32 %v1802, %v1803
    %v1805 = vld [vmem:[%s3] sm:$0x1]
    %s1806 = scalar_lea.vmem %s3, 1
    %v1807 = vld [vmem:[%s1806] sm:$0x1]
    %s1808 = scalar_lea.vmem %s3, 2
    %v1809 = vld [vmem:[%s1808] sm:$0x1]
    %s1810 = scalar_lea.vmem %s3, 3
    %v1811 = vld [vmem:[%s1810] sm:$0x1]
    %s1812 = scalar_lea.vmem %s3, 4
    %v1813 = vld [vmem:[%s1812] sm:$0x1]
    %s1814 = scalar_lea.vmem %s3, 5
    %v1815 = vld [vmem:[%s1814] sm:$0x1]
    %s1816 = scalar_lea.vmem %s3, 6
    %v1817 = vld [vmem:[%s1816] sm:$0x1]
    %s1818 = scalar_lea.vmem %s3, 7
    %v1819 = vld [vmem:[%s1818] sm:$0x1]
    %s1820 = scalar_lea.vmem %s3, 8
    %v1821 = vld [vmem:[%s1820] sm:$0x1]
    %v1822 = vmul.f32 %v526, %v1805
    %v1823 = vmul.f32 %v992, %v1811
    %v1824 = vadd.f32 %v1822, %v1823
    %v1825 = vmul.f32 %v1458, %v1817
    %v1826 = vadd.f32 %v1824, %v1825
    %v1827 = vmul.f32 %v456, %v1826
    %v1828 = vmul.f32 %v526, %v1807
    %v1829 = vmul.f32 %v992, %v1813
    %v1830 = vadd.f32 %v1828, %v1829
    %v1831 = vmul.f32 %v1458, %v1819
    %v1832 = vadd.f32 %v1830, %v1831
    %v1833 = vmul.f32 %v621, %v1832
    %v1834 = vadd.f32 %v1827, %v1833
    %v1835 = vmul.f32 %v526, %v1809
    %v1836 = vmul.f32 %v992, %v1815
    %v1837 = vadd.f32 %v1835, %v1836
    %v1838 = vmul.f32 %v1458, %v1821
    %v1839 = vadd.f32 %v1837, %v1838
    %v1840 = vmul.f32 %v787, %v1839
    %v1841 = vadd.f32 %v1834, %v1840
    %v1842 = vmul.f32 %v692, %v1805
    %v1843 = vmul.f32 %v1158, %v1811
    %v1844 = vadd.f32 %v1842, %v1843
    %v1845 = vmul.f32 %v1592, %v1817
    %v1846 = vadd.f32 %v1844, %v1845
    %v1847 = vmul.f32 %v921, %v1846
    %v1848 = vadd.f32 %v1841, %v1847
    %v1849 = vmul.f32 %v692, %v1807
    %v1850 = vmul.f32 %v1158, %v1813
    %v1851 = vadd.f32 %v1849, %v1850
    %v1852 = vmul.f32 %v1592, %v1819
    %v1853 = vadd.f32 %v1851, %v1852
    %v1854 = vmul.f32 %v1087, %v1853
    %v1855 = vadd.f32 %v1848, %v1854
    %v1856 = vmul.f32 %v692, %v1809
    %v1857 = vmul.f32 %v1158, %v1815
    %v1858 = vadd.f32 %v1856, %v1857
    %v1859 = vmul.f32 %v1592, %v1821
    %v1860 = vadd.f32 %v1858, %v1859
    %v1861 = vmul.f32 %v1253, %v1860
    %v1862 = vadd.f32 %v1855, %v1861
    %v1863 = vmul.f32 %v858, %v1805
    %v1864 = vmul.f32 %v1324, %v1811
    %v1865 = vadd.f32 %v1863, %v1864
    %v1866 = vmul.f32 %v1734, %v1817
    %v1867 = vadd.f32 %v1865, %v1866
    %v1868 = vmul.f32 %v1387, %v1867
    %v1869 = vadd.f32 %v1862, %v1868
    %v1870 = vmul.f32 %v858, %v1807
    %v1871 = vmul.f32 %v1324, %v1813
    %v1872 = vadd.f32 %v1870, %v1871
    %v1873 = vmul.f32 %v1734, %v1819
    %v1874 = vadd.f32 %v1872, %v1873
    %v1875 = vmul.f32 %v1521, %v1874
    %v1876 = vadd.f32 %v1869, %v1875
    %v1877 = vmul.f32 %v858, %v1809
    %v1878 = vmul.f32 %v1324, %v1815
    %v1879 = vadd.f32 %v1877, %v1878
    %v1880 = vmul.f32 %v1734, %v1821
    %v1881 = vadd.f32 %v1879, %v1880
    %v1882 = vmul.f32 %v1663, %v1881
    %v1883 = vadd.f32 %v1876, %v1882
    %v1884 = vsub.f32 %v1883, 1.0
    %v1885 = vmul.f32 %v1884, 0.5
    %vm1886 = vcmp.eq.s32.totalorder %v30, 0
    %v1887 = vlaneseq
    %v1888 = vshrl.u32 %v1887, 7
    %v1889 = vsub.s32 0, %v1888
    %v1890 = vrot.slane %v1885, %v1889
    %v1891 = vsel %vm1886, %v1890, 0.0
    %vm1892 = vcmp.eq.s32.totalorder %v30, 1
    %v1893 = vsel %vm1892, %v165, 0.0
    %v1894 = vadd.f32 %v1891, %v1893
    %vm1895 = vcmp.eq.s32.totalorder %v30, 2
    %v1896 = vlaneseq
    %v1897 = vshrl.u32 %v1896, 7
    %v1898 = vsub.s32 0, %v1897
    %v1899 = vrot.slane %v223, %v1898
    %v1900 = vsel %vm1895, %v1899, 0.0
    %v1901 = vadd.f32 %v1894, %v1900
    %vm1902 = vcmp.eq.s32.totalorder %v30, 3
    %v1903 = vsel %vm1902, %v1804, 0.0
    %v1904 = vadd.f32 %v1901, %v1903
    %1905 = vst [vmem:[#allocation2] sm:$0xff] %v1904
    // Predicated region
    $region22: #{tpu_custom_call.1} parent=1 // pred_check
      _
    $region23: #{tpu_custom_call.1} parent=1 // pred_check_branch
      %1907 = sbr.rel (0) target = $region25
    $region24: #{tpu_custom_call.1} parent=1 // pred_region
      %s1909 = ssub.s32 128, 128
      %1910 = vsyncadd [#allocation3], %s1909
      %s1912 = sshll.u32 [#allocation2], 4
      %s1913 = int_to_ptr.vmem [resolvable:$true] %s1912
      %1915 = dma.vmem_to_hbm [thread:$0]  %s1913, 128, %s5, [#allocation3]
    $region25: #{tpu_custom_call.1} parent=1 // pred_fallthru
      _
    // Predicated region
    $region26: #{tpu_custom_call.1} parent=1 // pred_check
      _
    $region27: #{tpu_custom_call.1} parent=1 // pred_check_branch
      %1917 = sbr.rel (0) target = $region29
    $region28: #{tpu_custom_call.1} parent=1 // pred_region
      %1918 = dma.done [#allocation3], 128
    $region29: #{tpu_custom_call.1} parent=1 // pred_fallthru
      _
    %1919 = vsyncpa [#allocation3], 1

</llo_original>
